<compile_context>
chip_gen: v6e
topology: v6e:2x2x1
jax: 0.10.0
libtpu: 0.0.40
codegen_flags: <defaults>
</compile_context>

<pallas_src>
import jax
import jax.numpy as jnp
from jax.experimental import pallas as pl
from jax.experimental.pallas import tpu as pltpu

# ----- external parameter-stack layout (mirrors the PyTorch module) -----
# weight-stack rows (all (H, H))
_W_HI1, _W_HI2, _W_HI3 = 0, 1, 2           # hi:  3x Linear(H, H)
_W_GNN_ROOT, _W_GNN_NBR = 3, 4             # Wh:  GraphConv root / neighbour weights
_W_HI2_1, _W_HI2_2, _W_HI2_3 = 5, 6, 7     # hi2: 3x Linear(H, H)
_W_LIN1 = 8                                # lin1
_W_LIN2_H, _W_LIN2_U = 9, 10               # lin2 split: half on h / half on lin1 out
# bias-stack rows (all (H,))
_B_HI1, _B_HI2, _B_HI3 = 0, 1, 2
_B_GNN, _B_BIAS = 3, 4                     # GraphConv bias, module `bias` parameter
_B_HI2_1, _B_HI2_2, _B_HI2_3 = 5, 6, 7
_B_LN_G, _B_LN_B = 8, 9                    # LayerNorm gamma / beta
_B_LIN1, _B_LIN2 = 10, 11

# ----- packed layouts as seen inside the kernel -----
_K_HI1, _K_HI2, _K_HI3 = 0, 1, 2           # (7, H, H)  bf16 single-K weights
_K_HI21, _K_HI22, _K_HI23 = 3, 4, 5
_K_LIN1 = 6
_K2_GNN, _K2_LIN2 = 0, 1                   # (2, 2H, H) bf16 fused-K weights
_KB_HI1, _KB_HI2, _KB_HI3 = 0, 1, 2        # (11, H)    f32 bias rows
_KB_GNNB = 3                               # b_gnn + module bias (pre-folded)
_KB_HI21, _KB_HI22, _KB_HI23 = 4, 5, 6
_KB_LN_G, _KB_LN_B = 7, 8
_KB_LIN1, _KB_LIN2 = 9, 10

_LN_EPS = 1e-5


def gru_gnn_kernel(h_ref, adj_ref, xfull_ref, w_hh_ref, w_2h_ref, b_ref, o_ref):
    f32, bf16 = jnp.float32, jnp.bfloat16
    tile_n = h_ref.shape[0]

    h = h_ref[...]                                            # (T, H) f32
    # node-feature tile sliced out of the resident full-x block (no duplicate DMA)
    row0 = pl.multiple_of(pl.program_id(0) * tile_n, tile_n)
    x = xfull_ref[pl.ds(row0, tile_n), :]                     # (T, H) bf16

    def mm(lhs, wi):       # (T,H) @ (H,H): bf16 operands, f32 accumulate (MXU)
        return jnp.dot(lhs.astype(bf16), w_hh_ref[wi], preferred_element_type=f32)

    def mm2(lhs, wi):      # (T,2H) @ (2H,H): fused K=256 MXU pass
        return jnp.dot(lhs, w_2h_ref[wi], preferred_element_type=f32)

    def bias(bi):          # (1, H) f32 row, broadcasts over (T, H)
        return b_ref[pl.ds(bi, 1), :]

    # haha = hi(h): Linear -> SiLU -> Linear -> SiLU -> Linear
    t = mm(h, _K_HI1) + bias(_KB_HI1)
    t = t * jax.nn.sigmoid(t)
    t = mm(t, _K_HI2) + bias(_KB_HI2)
    t = t * jax.nn.sigmoid(t)
    haha = mm(t, _K_HI3) + bias(_KB_HI3)

    # wrh = tanh(bias + GraphConv(x)) with sum aggregation over the dense adjacency
    agg = jnp.dot(adj_ref[...], xfull_ref[...], preferred_element_type=f32)  # (T, H)
    gnn_in = jnp.concatenate([x, agg.astype(bf16)], axis=-1)                 # (T, 2H)
    wrh = jnp.tanh(mm2(gnn_in, _K2_GNN) + bias(_KB_GNNB))

    # wrr = hi2(x): Linear -> Tanh -> Linear -> Tanh -> Linear
    t = jnp.tanh(mm(x, _K_HI21) + bias(_KB_HI21))
    t = jnp.tanh(mm(t, _K_HI22) + bias(_KB_HI22))
    wrr = mm(t, _K_HI23) + bias(_KB_HI23)

    z = (wrr + wrh) * haha

    # tan = LayerNorm(H) -> Tanh (f32)
    mu = jnp.mean(z, axis=-1, keepdims=True)
    var = jnp.mean((z - mu) * (z - mu), axis=-1, keepdims=True)
    tn = jnp.tanh((z - mu) * jax.lax.rsqrt(var + _LN_EPS) * bias(_KB_LN_G)
                  + bias(_KB_LN_B))

    # dropout(p=0.1) is identity at inference time
    # TODO(synk): training-mode dropout (PRNG mask) not implemented.
    u = mm(tn, _K_LIN1) + bias(_KB_LIN1)

    # hidden = h + lin2(cat(h, u))  -> single fused K=256 matmul
    hu = jnp.concatenate([h.astype(bf16), u.astype(bf16)], axis=-1)          # (T, 2H)
    o_ref[...] = (h + mm2(hu, _K2_LIN2) + bias(_KB_LIN2)).astype(o_ref.dtype)


def gru_gnn_forward(x, h, adj, w_stack, b_stack, *, tile_n=None):
    """x, h: (N, H) f32 node features / hidden state.
    adj: (N, N) dense adjacency, adj[i, j] = weight of edge j -> i.
    w_stack: (11, H, H) stacked weights.  b_stack: (12, H) stacked vectors.
    Returns the new hidden state, shape (N, H)."""
    N, H = h.shape
    assert x.shape == (N, H), "forward requires node-feature dim == hidden_size"
    assert adj.shape == (N, N)
    assert w_stack.shape == (11, H, H) and b_stack.shape == (12, H)

    bf16 = jnp.bfloat16

    def _round_up(v, m):
        return (v + m - 1) // m * m

    # Node tile: multiple of 128 so the bf16 adjacency sublane tiling and the
    # A@x contraction depth stay MXU/lane aligned. Default 128, up to 256.
    if tile_n is None:
        tile_n = min(256, _round_up(N, 128))
    tile_n = max(128, _round_up(tile_n, 128))
    n_blocks = pl.cdiv(N, tile_n)
    n_padded = n_blocks * tile_n
    n_pad = n_padded - N
    if n_pad:  # pad ragged tail so every block is full (no masked tail block)
        x = jnp.pad(x, ((0, n_pad), (0, 0)))
        h = jnp.pad(h, ((0, n_pad), (0, 0)))
        adj = jnp.pad(adj, ((0, n_pad), (0, n_pad)))

    # --- pack parameters for the kernel ---
    # 7 (H, H) weights used as single-K matmuls (bf16 for the MXU).
    w_hh = jnp.stack([
        w_stack[_W_HI1], w_stack[_W_HI2], w_stack[_W_HI3],
        w_stack[_W_HI2_1], w_stack[_W_HI2_2], w_stack[_W_HI2_3],
        w_stack[_W_LIN1],
    ]).astype(bf16)
    # 2 fused (2H, H) weights -> single K=256 MXU passes.
    w_2h = jnp.stack([
        jnp.concatenate([w_stack[_W_GNN_ROOT], w_stack[_W_GNN_NBR]], axis=0),
        jnp.concatenate([w_stack[_W_LIN2_H], w_stack[_W_LIN2_U]], axis=0),
    ]).astype(bf16)
    # 11 (H,) f32 rows; GraphConv bias and module-level bias pre-folded.
    b_pack = jnp.stack([
        b_stack[_B_HI1], b_stack[_B_HI2], b_stack[_B_HI3],
        b_stack[_B_GNN] + b_stack[_B_BIAS],
        b_stack[_B_HI2_1], b_stack[_B_HI2_2], b_stack[_B_HI2_3],
        b_stack[_B_LN_G], b_stack[_B_LN_B],
        b_stack[_B_LIN1], b_stack[_B_LIN2],
    ]).astype(jnp.float32)

    x_bf = x.astype(bf16)     # node features only feed matmuls -> bf16 everywhere
    adj_bf = adj.astype(bf16)  # small exact integer edge weights -> bf16 exact

    # TODO(synk): for very large graphs, add a second "arbitrary" grid axis that
    # K-tiles the A@x aggregation (adj (tile_n, tile_k), xfull (tile_k, H), f32
    # accumulator scratch) so VMEM stays bounded on v7x's 64 MiB; not needed at
    # these sizes.
    out = pl.pallas_call(
        gru_gnn_kernel,
        out_shape=jax.ShapeDtypeStruct((n_padded, H), h.dtype),
        grid_spec=pltpu.PrefetchScalarGridSpec(
            num_scalar_prefetch=0,
            grid=(n_blocks,),
            in_specs=[
                pl.BlockSpec((tile_n, H), lambda i: (i, 0)),            # h tile (f32)
                pl.BlockSpec((tile_n, n_padded), lambda i: (i, 0)),     # adj rows (bf16)
                pl.BlockSpec((n_padded, H), lambda i: (0, 0),           # full x (bf16)
                             pipeline_mode=pl.Buffered(1)),
                pl.BlockSpec((7, H, H), lambda i: (0, 0, 0),            # (H,H) weights
                             pipeline_mode=pl.Buffered(1)),
                pl.BlockSpec((2, 2 * H, H), lambda i: (0, 0, 0),        # fused weights
                             pipeline_mode=pl.Buffered(1)),
                pl.BlockSpec((11, H), lambda i: (0, 0),                 # bias rows
                             pipeline_mode=pl.Buffered(1)),
            ],
            out_specs=pl.BlockSpec((tile_n, H), lambda i: (i, 0)),
        ),
        compiler_params=pltpu.CompilerParams(
            dimension_semantics=("parallel",),
            # 128 MiB physical VMEM on v5e/v6e, 64 MiB on v7x -> 48 MiB is a
            # portable budget that still allows large node tiles; raise on
            # v5e/v6e for very large graphs.
            vmem_limit_bytes=48 * 1024 * 1024,
        ),
    )(h, adj_bf, x_bf, w_hh, w_2h, b_pack)

    return out[:N] if n_pad else out


def gru_gnn_reference(x, h, adj, w_stack, b_stack):
    """Pure-JAX reference mirroring the kernel's numerics (bf16 matmul operands,
    f32 accumulation, f32 elementwise)."""
    bf, f32 = jnp.bfloat16, jnp.float32
    w, b = w_stack, b_stack

    def mm(lhs, wmat):
        return jnp.dot(lhs.astype(bf), wmat.astype(bf), preferred_element_type=f32)

    t = mm(h, w[_W_HI1]) + b[_B_HI1]
    t = t * jax.nn.sigmoid(t)
    t = mm(t, w[_W_HI2]) + b[_B_HI2]
    t = t * jax.nn.sigmoid(t)
    haha = mm(t, w[_W_HI3]) + b[_B_HI3]

    agg = jnp.dot(adj.astype(bf), x.astype(bf), preferred_element_type=f32)
    gnn = mm(x, w[_W_GNN_ROOT]) + mm(agg, w[_W_GNN_NBR]) + b[_B_GNN]
    wrh = jnp.tanh(b[_B_BIAS] + gnn)

    t = jnp.tanh(mm(x, w[_W_HI2_1]) + b[_B_HI2_1])
    t = jnp.tanh(mm(t, w[_W_HI2_2]) + b[_B_HI2_2])
    wrr = mm(t, w[_W_HI2_3]) + b[_B_HI2_3]

    z = (wrr + wrh) * haha
    mu = jnp.mean(z, axis=-1, keepdims=True)
    var = jnp.mean((z - mu) ** 2, axis=-1, keepdims=True)
    tn = jnp.tanh((z - mu) * jax.lax.rsqrt(var + _LN_EPS) * b[_B_LN_G] + b[_B_LN_B])

    u = mm(tn, w[_W_LIN1]) + b[_B_LIN1]
    return h + mm(h, w[_W_LIN2_H]) + mm(u, w[_W_LIN2_U]) + b[_B_LIN2]


if __name__ == "__main__":
    N = 64     # graph nodes
    H = 128    # hidden_size (== node-feature dim, required since hi2 acts on x)

    key = jax.random.PRNGKey(0)
    kx, kh, kw, kb = jax.random.split(key, 4)

    x = 0.5 * jax.random.normal(kx, (N, H), dtype=jnp.float32)
    h = 0.5 * jax.random.normal(kh, (N, H), dtype=jnp.float32)

    # xavier-uniform-ish init for matrices, uniform(-1/sqrt(H), 1/sqrt(H)) for the
    # length-H vectors (mirrors reset_parameters).
    limit = (6.0 / (2.0 * H)) ** 0.5
    w_stack = jax.random.uniform(kw, (11, H, H), minval=-limit, maxval=limit,
                                 dtype=jnp.float32)
    std = 1.0 / (H ** 0.5)
    b_stack = jax.random.uniform(kb, (12, H), minval=-std, maxval=std,
                                 dtype=jnp.float32)

    # deterministic undirected ring graph, PyG-style edge_index (2, E), densified:
    # adj[i, j] = 1 iff there is an edge j -> i (sum aggregation)
    src = jnp.arange(N, dtype=jnp.int32)
    dst = (src + 1) % N
    edge_index = jnp.stack([jnp.concatenate([src, dst]),
                            jnp.concatenate([dst, src])])
    adj = jnp.zeros((N, N), jnp.float32).at[edge_index[1], edge_index[0]].add(1.0)

    out = gru_gnn_forward(x, h, adj, w_stack, b_stack)
    out = jax.block_until_ready(out)

    ref = gru_gnn_reference(x, h, adj, w_stack, b_stack)
    assert out.shape == (N, H)
    max_err = float(jnp.max(jnp.abs(out - ref)))
    assert jnp.allclose(out, ref, atol=2e-3, rtol=2e-3), max_err
    print("KERNEL_OK")
</pallas_src>

<mosaic_0001>
module attributes {stable_mosaic.version = 11 : i64} {
  func.func @gru_gnn_kernel(%arg0: i32, %arg1: memref<128x128xf32, #tpu.memory_space<vmem>>, %arg2: memref<128x128xbf16, #tpu.memory_space<vmem>>, %arg3: memref<128x128xbf16, #tpu.memory_space<vmem>>, %arg4: memref<7x128x128xbf16, #tpu.memory_space<vmem>>, %arg5: memref<2x256x128xbf16, #tpu.memory_space<vmem>>, %arg6: memref<11x128xf32, #tpu.memory_space<vmem>>, %arg7: memref<128x128xf32, #tpu.memory_space<vmem>>) attributes {dimension_semantics = [#tpu.dimension_semantics<parallel>], iteration_bounds = array<i64: 1>, scalar_prefetch = 0 : i64, scratch_operands = 0 : i64, tpu.core_type = #tpu.core_type<tc>, window_params = [{transform_indices = @transform_0, window_bounds = array<i64: 128, 128>}, {transform_indices = @transform_1, window_bounds = array<i64: 128, 128>}, {pipeline_mode = #tpu.pipeline_mode<synchronous>, transform_indices = @transform_2, window_bounds = array<i64: 128, 128>}, {pipeline_mode = #tpu.pipeline_mode<synchronous>, transform_indices = @transform_3, window_bounds = array<i64: 7, 128, 128>}, {pipeline_mode = #tpu.pipeline_mode<synchronous>, transform_indices = @transform_4, window_bounds = array<i64: 2, 256, 128>}, {pipeline_mode = #tpu.pipeline_mode<synchronous>, transform_indices = @transform_5, window_bounds = array<i64: 11, 128>}, {transform_indices = @transform_6, window_bounds = array<i64: 128, 128>}]} {
    %c0 = arith.constant 0 : index
    %c0_0 = arith.constant 0 : index
    %0 = vector.load %arg1[%c0, %c0_0] : memref<128x128xf32, #tpu.memory_space<vmem>>, vector<128x128xf32>
    %c128_i32 = arith.constant 128 : i32
    %1 = arith.muli %arg0, %c128_i32 : i32
    %2 = tpu.assume_multiple %1, 128 : i32
    %3 = arith.index_cast %2 : i32 to index
    %c0_1 = arith.constant 0 : index
    %4 = vector.load %arg3[%3, %c0_1] : memref<128x128xbf16, #tpu.memory_space<vmem>>, vector<128x128xbf16>
    %5 = arith.truncf %0 : vector<128x128xf32> to vector<128x128xbf16>
    %c0_2 = arith.constant 0 : index
    %c0_3 = arith.constant 0 : index
    %c0_4 = arith.constant 0 : index
    %6 = vector.load %arg4[%c0_2, %c0_3, %c0_4] : memref<7x128x128xbf16, #tpu.memory_space<vmem>>, vector<1x128x128xbf16>
    %7 = vector.shape_cast %6 : vector<1x128x128xbf16> to vector<128x128xbf16>
    %cst = arith.constant dense<0.000000e+00> : vector<128x128xf32>
    %8 = tpu.matmul %5, %7, %cst {dimension_numbers = #tpu.dot_dimension_numbers<[1], [0], [0], [1], [0, 0, 1, 1], [], []>} : vector<128x128xbf16>, vector<128x128xbf16>, vector<128x128xf32> -> vector<128x128xf32>
    %c0_5 = arith.constant 0 : index
    %c0_6 = arith.constant 0 : index
    %9 = vector.load %arg6[%c0_5, %c0_6] : memref<11x128xf32, #tpu.memory_space<vmem>>, vector<1x128xf32>
    %10 = vector.broadcast %9 : vector<1x128xf32> to vector<128x128xf32>
    %11 = arith.addf %8, %10 : vector<128x128xf32>
    %12 = arith.negf %11 : vector<128x128xf32>
    %13 = math.exp %12 : vector<128x128xf32>
    %cst_7 = arith.constant 1.000000e+00 : f32
    %14 = vector.broadcast %cst_7 : f32 to vector<128x128xf32>
    %15 = arith.addf %14, %13 : vector<128x128xf32>
    %16 = arith.divf %14, %15 : vector<128x128xf32>
    %17 = arith.mulf %11, %16 : vector<128x128xf32>
    %18 = arith.truncf %17 : vector<128x128xf32> to vector<128x128xbf16>
    %c1 = arith.constant 1 : index
    %c0_8 = arith.constant 0 : index
    %c0_9 = arith.constant 0 : index
    %19 = vector.load %arg4[%c1, %c0_8, %c0_9] : memref<7x128x128xbf16, #tpu.memory_space<vmem>>, vector<1x128x128xbf16>
    %20 = vector.shape_cast %19 : vector<1x128x128xbf16> to vector<128x128xbf16>
    %cst_10 = arith.constant dense<0.000000e+00> : vector<128x128xf32>
    %21 = tpu.matmul %18, %20, %cst_10 {dimension_numbers = #tpu.dot_dimension_numbers<[1], [0], [0], [1], [0, 0, 1, 1], [], []>} : vector<128x128xbf16>, vector<128x128xbf16>, vector<128x128xf32> -> vector<128x128xf32>
    %c1_11 = arith.constant 1 : index
    %c0_12 = arith.constant 0 : index
    %22 = vector.load %arg6[%c1_11, %c0_12] : memref<11x128xf32, #tpu.memory_space<vmem>>, vector<1x128xf32>
    %23 = vector.broadcast %22 : vector<1x128xf32> to vector<128x128xf32>
    %24 = arith.addf %21, %23 : vector<128x128xf32>
    %25 = arith.negf %24 : vector<128x128xf32>
    %26 = math.exp %25 : vector<128x128xf32>
    %cst_13 = arith.constant 1.000000e+00 : f32
    %27 = vector.broadcast %cst_13 : f32 to vector<128x128xf32>
    %28 = arith.addf %27, %26 : vector<128x128xf32>
    %29 = arith.divf %27, %28 : vector<128x128xf32>
    %30 = arith.mulf %24, %29 : vector<128x128xf32>
    %31 = arith.truncf %30 : vector<128x128xf32> to vector<128x128xbf16>
    %c2 = arith.constant 2 : index
    %c0_14 = arith.constant 0 : index
    %c0_15 = arith.constant 0 : index
    %32 = vector.load %arg4[%c2, %c0_14, %c0_15] : memref<7x128x128xbf16, #tpu.memory_space<vmem>>, vector<1x128x128xbf16>
    %33 = vector.shape_cast %32 : vector<1x128x128xbf16> to vector<128x128xbf16>
    %cst_16 = arith.constant dense<0.000000e+00> : vector<128x128xf32>
    %34 = tpu.matmul %31, %33, %cst_16 {dimension_numbers = #tpu.dot_dimension_numbers<[1], [0], [0], [1], [0, 0, 1, 1], [], []>} : vector<128x128xbf16>, vector<128x128xbf16>, vector<128x128xf32> -> vector<128x128xf32>
    %c2_17 = arith.constant 2 : index
    %c0_18 = arith.constant 0 : index
    %35 = vector.load %arg6[%c2_17, %c0_18] : memref<11x128xf32, #tpu.memory_space<vmem>>, vector<1x128xf32>
    %36 = vector.broadcast %35 : vector<1x128xf32> to vector<128x128xf32>
    %37 = arith.addf %34, %36 : vector<128x128xf32>
    %c0_19 = arith.constant 0 : index
    %c0_20 = arith.constant 0 : index
    %38 = vector.load %arg2[%c0_19, %c0_20] : memref<128x128xbf16, #tpu.memory_space<vmem>>, vector<128x128xbf16>
    %c0_21 = arith.constant 0 : index
    %c0_22 = arith.constant 0 : index
    %39 = vector.load %arg3[%c0_21, %c0_22] : memref<128x128xbf16, #tpu.memory_space<vmem>>, vector<128x128xbf16>
    %cst_23 = arith.constant dense<0.000000e+00> : vector<128x128xf32>
    %40 = tpu.matmul %38, %39, %cst_23 {dimension_numbers = #tpu.dot_dimension_numbers<[1], [0], [0], [1], [0, 0, 1, 1], [], []>} : vector<128x128xbf16>, vector<128x128xbf16>, vector<128x128xf32> -> vector<128x128xf32>
    %41 = arith.truncf %40 : vector<128x128xf32> to vector<128x128xbf16>
    %42 = tpu.concatenate %4, %41 in 1 : vector<128x128xbf16>, vector<128x128xbf16> -> vector<128x256xbf16>
    %c0_24 = arith.constant 0 : index
    %c0_25 = arith.constant 0 : index
    %c0_26 = arith.constant 0 : index
    %43 = vector.load %arg5[%c0_24, %c0_25, %c0_26] : memref<2x256x128xbf16, #tpu.memory_space<vmem>>, vector<1x256x128xbf16>
    %44 = vector.shape_cast %43 : vector<1x256x128xbf16> to vector<256x128xbf16>
    %cst_27 = arith.constant dense<0.000000e+00> : vector<128x128xf32>
    %45 = tpu.matmul %42, %44, %cst_27 {dimension_numbers = #tpu.dot_dimension_numbers<[1], [0], [0], [1], [0, 0, 1, 1], [], []>} : vector<128x256xbf16>, vector<256x128xbf16>, vector<128x128xf32> -> vector<128x128xf32>
    %c3 = arith.constant 3 : index
    %c0_28 = arith.constant 0 : index
    %46 = vector.load %arg6[%c3, %c0_28] : memref<11x128xf32, #tpu.memory_space<vmem>>, vector<1x128xf32>
    %47 = vector.broadcast %46 : vector<1x128xf32> to vector<128x128xf32>
    %48 = arith.addf %45, %47 : vector<128x128xf32>
    %49 = math.tanh %48 : vector<128x128xf32>
    %c3_29 = arith.constant 3 : index
    %c0_30 = arith.constant 0 : index
    %c0_31 = arith.constant 0 : index
    %50 = vector.load %arg4[%c3_29, %c0_30, %c0_31] : memref<7x128x128xbf16, #tpu.memory_space<vmem>>, vector<1x128x128xbf16>
    %51 = vector.shape_cast %50 : vector<1x128x128xbf16> to vector<128x128xbf16>
    %cst_32 = arith.constant dense<0.000000e+00> : vector<128x128xf32>
    %52 = tpu.matmul %4, %51, %cst_32 {dimension_numbers = #tpu.dot_dimension_numbers<[1], [0], [0], [1], [0, 0, 1, 1], [], []>} : vector<128x128xbf16>, vector<128x128xbf16>, vector<128x128xf32> -> vector<128x128xf32>
    %c4 = arith.constant 4 : index
    %c0_33 = arith.constant 0 : index
    %53 = vector.load %arg6[%c4, %c0_33] : memref<11x128xf32, #tpu.memory_space<vmem>>, vector<1x128xf32>
    %54 = vector.broadcast %53 : vector<1x128xf32> to vector<128x128xf32>
    %55 = arith.addf %52, %54 : vector<128x128xf32>
    %56 = math.tanh %55 : vector<128x128xf32>
    %57 = arith.truncf %56 : vector<128x128xf32> to vector<128x128xbf16>
    %c4_34 = arith.constant 4 : index
    %c0_35 = arith.constant 0 : index
    %c0_36 = arith.constant 0 : index
    %58 = vector.load %arg4[%c4_34, %c0_35, %c0_36] : memref<7x128x128xbf16, #tpu.memory_space<vmem>>, vector<1x128x128xbf16>
    %59 = vector.shape_cast %58 : vector<1x128x128xbf16> to vector<128x128xbf16>
    %cst_37 = arith.constant dense<0.000000e+00> : vector<128x128xf32>
    %60 = tpu.matmul %57, %59, %cst_37 {dimension_numbers = #tpu.dot_dimension_numbers<[1], [0], [0], [1], [0, 0, 1, 1], [], []>} : vector<128x128xbf16>, vector<128x128xbf16>, vector<128x128xf32> -> vector<128x128xf32>
    %c5 = arith.constant 5 : index
    %c0_38 = arith.constant 0 : index
    %61 = vector.load %arg6[%c5, %c0_38] : memref<11x128xf32, #tpu.memory_space<vmem>>, vector<1x128xf32>
    %62 = vector.broadcast %61 : vector<1x128xf32> to vector<128x128xf32>
    %63 = arith.addf %60, %62 : vector<128x128xf32>
    %64 = math.tanh %63 : vector<128x128xf32>
    %65 = arith.truncf %64 : vector<128x128xf32> to vector<128x128xbf16>
    %c5_39 = arith.constant 5 : index
    %c0_40 = arith.constant 0 : index
    %c0_41 = arith.constant 0 : index
    %66 = vector.load %arg4[%c5_39, %c0_40, %c0_41] : memref<7x128x128xbf16, #tpu.memory_space<vmem>>, vector<1x128x128xbf16>
    %67 = vector.shape_cast %66 : vector<1x128x128xbf16> to vector<128x128xbf16>
    %cst_42 = arith.constant dense<0.000000e+00> : vector<128x128xf32>
    %68 = tpu.matmul %65, %67, %cst_42 {dimension_numbers = #tpu.dot_dimension_numbers<[1], [0], [0], [1], [0, 0, 1, 1], [], []>} : vector<128x128xbf16>, vector<128x128xbf16>, vector<128x128xf32> -> vector<128x128xf32>
    %c6 = arith.constant 6 : index
    %c0_43 = arith.constant 0 : index
    %69 = vector.load %arg6[%c6, %c0_43] : memref<11x128xf32, #tpu.memory_space<vmem>>, vector<1x128xf32>
    %70 = vector.broadcast %69 : vector<1x128xf32> to vector<128x128xf32>
    %71 = arith.addf %68, %70 : vector<128x128xf32>
    %72 = arith.addf %71, %49 : vector<128x128xf32>
    %73 = arith.mulf %72, %37 : vector<128x128xf32>
    %cst_44 = arith.constant dense<0.000000e+00> : vector<128xf32>
    %74 = vector.multi_reduction <add>, %73, %cst_44 [1] : vector<128x128xf32> to vector<128xf32>
    %75 = vector.shape_cast %74 : vector<128xf32> to vector<128x1xf32>
    %cst_45 = arith.constant 1.280000e+02 : f32
    %76 = vector.broadcast %cst_45 : f32 to vector<128x1xf32>
    %77 = arith.divf %75, %76 : vector<128x1xf32>
    %78 = vector.broadcast %77 : vector<128x1xf32> to vector<128x128xf32>
    %79 = arith.subf %73, %78 : vector<128x128xf32>
    %80 = vector.broadcast %77 : vector<128x1xf32> to vector<128x128xf32>
    %81 = arith.subf %73, %80 : vector<128x128xf32>
    %82 = arith.mulf %79, %81 : vector<128x128xf32>
    %cst_46 = arith.constant dense<0.000000e+00> : vector<128xf32>
    %83 = vector.multi_reduction <add>, %82, %cst_46 [1] : vector<128x128xf32> to vector<128xf32>
    %84 = vector.shape_cast %83 : vector<128xf32> to vector<128x1xf32>
    %cst_47 = arith.constant 1.280000e+02 : f32
    %85 = vector.broadcast %cst_47 : f32 to vector<128x1xf32>
    %86 = arith.divf %84, %85 : vector<128x1xf32>
    %87 = vector.broadcast %77 : vector<128x1xf32> to vector<128x128xf32>
    %88 = arith.subf %73, %87 : vector<128x128xf32>
    %cst_48 = arith.constant 9.99999974E-6 : f32
    %89 = vector.broadcast %cst_48 : f32 to vector<128x1xf32>
    %90 = arith.addf %86, %89 : vector<128x1xf32>
    %91 = math.rsqrt %90 : vector<128x1xf32>
    %92 = vector.broadcast %91 : vector<128x1xf32> to vector<128x128xf32>
    %93 = arith.mulf %88, %92 : vector<128x128xf32>
    %c7 = arith.constant 7 : index
    %c0_49 = arith.constant 0 : index
    %94 = vector.load %arg6[%c7, %c0_49] : memref<11x128xf32, #tpu.memory_space<vmem>>, vector<1x128xf32>
    %95 = vector.broadcast %94 : vector<1x128xf32> to vector<128x128xf32>
    %96 = arith.mulf %93, %95 : vector<128x128xf32>
    %c8 = arith.constant 8 : index
    %c0_50 = arith.constant 0 : index
    %97 = vector.load %arg6[%c8, %c0_50] : memref<11x128xf32, #tpu.memory_space<vmem>>, vector<1x128xf32>
    %98 = vector.broadcast %97 : vector<1x128xf32> to vector<128x128xf32>
    %99 = arith.addf %96, %98 : vector<128x128xf32>
    %100 = math.tanh %99 : vector<128x128xf32>
    %101 = arith.truncf %100 : vector<128x128xf32> to vector<128x128xbf16>
    %c6_51 = arith.constant 6 : index
    %c0_52 = arith.constant 0 : index
    %c0_53 = arith.constant 0 : index
    %102 = vector.load %arg4[%c6_51, %c0_52, %c0_53] : memref<7x128x128xbf16, #tpu.memory_space<vmem>>, vector<1x128x128xbf16>
    %103 = vector.shape_cast %102 : vector<1x128x128xbf16> to vector<128x128xbf16>
    %cst_54 = arith.constant dense<0.000000e+00> : vector<128x128xf32>
    %104 = tpu.matmul %101, %103, %cst_54 {dimension_numbers = #tpu.dot_dimension_numbers<[1], [0], [0], [1], [0, 0, 1, 1], [], []>} : vector<128x128xbf16>, vector<128x128xbf16>, vector<128x128xf32> -> vector<128x128xf32>
    %c9 = arith.constant 9 : index
    %c0_55 = arith.constant 0 : index
    %105 = vector.load %arg6[%c9, %c0_55] : memref<11x128xf32, #tpu.memory_space<vmem>>, vector<1x128xf32>
    %106 = vector.broadcast %105 : vector<1x128xf32> to vector<128x128xf32>
    %107 = arith.addf %104, %106 : vector<128x128xf32>
    %108 = arith.truncf %0 : vector<128x128xf32> to vector<128x128xbf16>
    %109 = arith.truncf %107 : vector<128x128xf32> to vector<128x128xbf16>
    %110 = tpu.concatenate %108, %109 in 1 : vector<128x128xbf16>, vector<128x128xbf16> -> vector<128x256xbf16>
    %c1_56 = arith.constant 1 : index
    %c0_57 = arith.constant 0 : index
    %c0_58 = arith.constant 0 : index
    %111 = vector.load %arg5[%c1_56, %c0_57, %c0_58] : memref<2x256x128xbf16, #tpu.memory_space<vmem>>, vector<1x256x128xbf16>
    %112 = vector.shape_cast %111 : vector<1x256x128xbf16> to vector<256x128xbf16>
    %cst_59 = arith.constant dense<0.000000e+00> : vector<128x128xf32>
    %113 = tpu.matmul %110, %112, %cst_59 {dimension_numbers = #tpu.dot_dimension_numbers<[1], [0], [0], [1], [0, 0, 1, 1], [], []>} : vector<128x256xbf16>, vector<256x128xbf16>, vector<128x128xf32> -> vector<128x128xf32>
    %114 = arith.addf %0, %113 : vector<128x128xf32>
    %c10 = arith.constant 10 : index
    %c0_60 = arith.constant 0 : index
    %115 = vector.load %arg6[%c10, %c0_60] : memref<11x128xf32, #tpu.memory_space<vmem>>, vector<1x128xf32>
    %116 = vector.broadcast %115 : vector<1x128xf32> to vector<128x128xf32>
    %117 = arith.addf %114, %116 : vector<128x128xf32>
    %c0_61 = arith.constant 0 : index
    %c0_62 = arith.constant 0 : index
    %118 = vector.load %arg7[%c0_61, %c0_62] : memref<128x128xf32, #tpu.memory_space<vmem>>, vector<128x128xf32>
    tpu.vector_store %arg7[%c0_61, %c0_62], %117 {strides = array<i32>} : memref<128x128xf32, #tpu.memory_space<vmem>>, vector<128x128xf32>,
    return
  }
  func.func @transform_0(%arg0: i32) -> (i32, i32) {
    %c0_i32 = arith.constant 0 : i32
    %c0_i32_0 = arith.constant 0 : i32
    return %arg0, %c0_i32 : i32, i32
  }
  func.func @transform_1(%arg0: i32) -> (i32, i32) {
    %c0_i32 = arith.constant 0 : i32
    %c0_i32_0 = arith.constant 0 : i32
    return %arg0, %c0_i32 : i32, i32
  }
  func.func @transform_2(%arg0: i32) -> (i32, i32) {
    %c0_i32 = arith.constant 0 : i32
    %c0_i32_0 = arith.constant 0 : i32
    %c0_i32_1 = arith.constant 0 : i32
    return %c0_i32, %c0_i32_0 : i32, i32
  }
  func.func @transform_3(%arg0: i32) -> (i32, i32, i32) {
    %c0_i32 = arith.constant 0 : i32
    %c0_i32_0 = arith.constant 0 : i32
    %c0_i32_1 = arith.constant 0 : i32
    %c0_i32_2 = arith.constant 0 : i32
    return %c0_i32, %c0_i32_0, %c0_i32_1 : i32, i32, i32
  }
  func.func @transform_4(%arg0: i32) -> (i32, i32, i32) {
    %c0_i32 = arith.constant 0 : i32
    %c0_i32_0 = arith.constant 0 : i32
    %c0_i32_1 = arith.constant 0 : i32
    %c0_i32_2 = arith.constant 0 : i32
    return %c0_i32, %c0_i32_0, %c0_i32_1 : i32, i32, i32
  }
  func.func @transform_5(%arg0: i32) -> (i32, i32) {
    %c0_i32 = arith.constant 0 : i32
    %c0_i32_0 = arith.constant 0 : i32
    %c0_i32_1 = arith.constant 0 : i32
    return %c0_i32, %c0_i32_0 : i32, i32
  }
  func.func @transform_6(%arg0: i32) -> (i32, i32) {
    %c0_i32 = arith.constant 0 : i32
    %c0_i32_0 = arith.constant 0 : i32
    return %arg0, %c0_i32 : i32, i32
  }
}

</mosaic_0001>

<llo_original>
// kernel: tpu_custom_call.1
$region0: #{tpu_custom_call.1}
  #allocation0 [shape = 'u32[]', space=smem, size = 0x4, offset = 0x4, fixed_abs, tag = 'smem constant byte address 0x4 - core index']
  #allocation1 [shape = 'u32[144,128]{1,0:T(1,128)}', space=vmem, size = 0x12000, scoped, tag = 'internal scratch']
  %s0 = inlined_call_operand.hbm [shape: f32[128,128], index: 0, kind: input, shape index: {}]
  %s1 = inlined_call_operand.hbm [shape: bf16[128,128], index: 1, kind: input, shape index: {}]
  %s2 = inlined_call_operand.hbm [shape: bf16[128,128], index: 2, kind: input, shape index: {}]
  %s3 = inlined_call_operand.hbm [shape: bf16[7,128,128], index: 3, kind: input, shape index: {}]
  %s4 = inlined_call_operand.hbm [shape: bf16[2,256,128], index: 4, kind: input, shape index: {}]
  %s5 = inlined_call_operand.hbm [shape: f32[11,128], index: 5, kind: input, shape index: {}]
  %s6 = inlined_call_operand.hbm [shape: f32[128,128], index: 6, kind: output, shape index: {}]
  %s7 = sld [smem:[#allocation0]]
  $region58: #{tpu_custom_call.1} parent=0
    _
  %s9 = ssub.s32 1, %s7
  %s10 = scalar_select 0, %s9, %s7
  $region1: #{tpu_custom_call.1} parent=0
    #allocation2 [shape = 'u8[65536]{0}', space=vmem, size = 0x10000, scoped, tag = 'input window, operand 0, single buffered']
    #allocation3 [shape = 's32[1]{0}', space=sflag, size = 0x4, scoped, tag = 'scoped memory for tpu_custom_call.1']
    #allocation4 [shape = 's32[1]{0}', space=sflag, size = 0x4, scoped, tag = 'scoped memory for tpu_custom_call.1']
    #allocation5 [shape = 'u8[32768]{0}', space=vmem, size = 0x8000, scoped, tag = 'input window, operand 1, single buffered']
    #allocation6 [shape = 's32[1]{0}', space=sflag, size = 0x4, scoped, tag = 'scoped memory for tpu_custom_call.1']
    #allocation7 [shape = 'u8[32768]{0}', space=vmem, size = 0x8000, scoped, tag = 'input window, operand 2, single buffered']
    #allocation8 [shape = 'u8[229376]{0}', space=vmem, size = 0x38000, scoped, tag = 'input window, operand 3, single buffered']
    #allocation9 [shape = 's32[1]{0}', space=sflag, size = 0x4, scoped, tag = 'scoped memory for tpu_custom_call.1']
    #allocation10 [shape = 'u8[131072]{0}', space=vmem, size = 0x20000, scoped, tag = 'input window, operand 4, single buffered']
    #allocation11 [shape = 'u8[8192]{0}', space=vmem, size = 0x2000, scoped, tag = 'input window, operand 5, single buffered']
    #allocation12 [shape = 's32[1]{0}', space=sflag, size = 0x4, scoped, tag = 'scoped memory for tpu_custom_call.1']
    #allocation13 [shape = 'u8[65536]{0}', space=vmem, size = 0x10000, scoped, tag = 'output window, operand 0, single buffered']
    %11 = vsyncpa [#allocation3], 0
    %12 = vsyncpa [#allocation6], 0
    %13 = vsyncpa [#allocation9], 0
    %14 = vsyncpa [#allocation12], 0
    %15 = vsyncpa [#allocation4], 0
    // Predicated region
    $region2: #{tpu_custom_call.1} parent=1 // pred_check
      _
    $region3: #{tpu_custom_call.1} parent=1 // pred_check_branch
      %17 = sbr.rel (0) target = $region5
    $region4: #{tpu_custom_call.1} parent=1 // pred_region
      %s19 = ssub.s32 2048, 2048
      %20 = vsyncadd [#allocation3], %s19
      %s21 = sshll.u32 [#allocation2], 4
      %s22 = int_to_ptr.vmem [resolvable:$true] %s21
      %27 = dma.hbm_to_vmem [thread:$0]  %s0, 2048, %s22, [#allocation3], 128, 128, 8
    $region5: #{tpu_custom_call.1} parent=1 // pred_fallthru
      _
    // Predicated region
    $region6: #{tpu_custom_call.1} parent=1 // pred_check
      _
    $region7: #{tpu_custom_call.1} parent=1 // pred_check_branch
      %29 = sbr.rel (0) target = $region9
    $region8: #{tpu_custom_call.1} parent=1 // pred_region
      %s31 = ssub.s32 1024, 1024
      %32 = vsyncadd [#allocation6], %s31
      %s33 = sshll.u32 [#allocation5], 4
      %s34 = int_to_ptr.vmem [resolvable:$true] %s33
      %39 = dma.hbm_to_vmem [thread:$0]  %s1, 1024, %s34, [#allocation6], 64, 64, 4
    $region9: #{tpu_custom_call.1} parent=1 // pred_fallthru
      _
    // Predicated region
    $region10: #{tpu_custom_call.1} parent=1 // pred_check
      _
    $region11: #{tpu_custom_call.1} parent=1 // pred_check_branch
      %41 = sbr.rel (0) target = $region13
    $region12: #{tpu_custom_call.1} parent=1 // pred_region
      %s43 = ssub.s32 1024, 1024
      %44 = vsyncadd [#allocation6], %s43
      %s45 = sshll.u32 [#allocation7], 4
      %s46 = int_to_ptr.vmem [resolvable:$true] %s45
      %51 = dma.hbm_to_vmem [thread:$0]  %s2, 1024, %s46, [#allocation6], 64, 64, 4
    $region13: #{tpu_custom_call.1} parent=1 // pred_fallthru
      _
    // Predicated region
    $region14: #{tpu_custom_call.1} parent=1 // pred_check
      _
    $region15: #{tpu_custom_call.1} parent=1 // pred_check_branch
      %53 = sbr.rel (0) target = $region17
    $region16: #{tpu_custom_call.1} parent=1 // pred_region
      %s55 = ssub.s32 7168, 7168
      %56 = vsyncadd [#allocation9], %s55
      %s57 = sshll.u32 [#allocation8], 4
      %s58 = int_to_ptr.vmem [resolvable:$true] %s57
      %63 = dma.hbm_to_vmem [thread:$0]  %s3, 7168, %s58, [#allocation9], 64, 64, 4
    $region17: #{tpu_custom_call.1} parent=1 // pred_fallthru
      _
    // Predicated region
    $region18: #{tpu_custom_call.1} parent=1 // pred_check
      _
    $region19: #{tpu_custom_call.1} parent=1 // pred_check_branch
      %65 = sbr.rel (0) target = $region21
    $region20: #{tpu_custom_call.1} parent=1 // pred_region
      %s67 = ssub.s32 4096, 4096
      %68 = vsyncadd [#allocation9], %s67
      %s69 = sshll.u32 [#allocation10], 4
      %s70 = int_to_ptr.vmem [resolvable:$true] %s69
      %75 = dma.hbm_to_vmem [thread:$0]  %s4, 4096, %s70, [#allocation9], 64, 64, 4
    $region21: #{tpu_custom_call.1} parent=1 // pred_fallthru
      _
    // Predicated region
    $region22: #{tpu_custom_call.1} parent=1 // pred_check
      _
    $region23: #{tpu_custom_call.1} parent=1 // pred_check_branch
      %77 = sbr.rel (0) target = $region25
    $region24: #{tpu_custom_call.1} parent=1 // pred_region
      %s79 = ssub.s32 256, 256
      %80 = vsyncadd [#allocation12], %s79
      %s81 = sshll.u32 [#allocation11], 4
      %s82 = int_to_ptr.vmem [resolvable:$true] %s81
      %87 = dma.hbm_to_vmem [thread:$0]  %s5, 256, %s82, [#allocation12], 128, 128, 8
    $region25: #{tpu_custom_call.1} parent=1 // pred_fallthru
      _
    // Predicated region
    $region26: #{tpu_custom_call.1} parent=1 // pred_check
      _
    $region27: #{tpu_custom_call.1} parent=1 // pred_check_branch
      %89 = sbr.rel (0) target = $region29
    $region28: #{tpu_custom_call.1} parent=1 // pred_region
      %90 = dma.done [#allocation3], 2048
    $region29: #{tpu_custom_call.1} parent=1 // pred_fallthru
      _
    // Predicated region
    $region30: #{tpu_custom_call.1} parent=1 // pred_check
      _
    $region31: #{tpu_custom_call.1} parent=1 // pred_check_branch
      %92 = sbr.rel (0) target = $region33
    $region32: #{tpu_custom_call.1} parent=1 // pred_region
      %93 = dma.done [#allocation6], 1024
    $region33: #{tpu_custom_call.1} parent=1 // pred_fallthru
      _
    // Predicated region
    $region34: #{tpu_custom_call.1} parent=1 // pred_check
      _
    $region35: #{tpu_custom_call.1} parent=1 // pred_check_branch
      %95 = sbr.rel (0) target = $region37
    $region36: #{tpu_custom_call.1} parent=1 // pred_region
      %96 = dma.done [#allocation6], 1024
    $region37: #{tpu_custom_call.1} parent=1 // pred_fallthru
      _
    // Predicated region
    $region38: #{tpu_custom_call.1} parent=1 // pred_check
      _
    $region39: #{tpu_custom_call.1} parent=1 // pred_check_branch
      %98 = sbr.rel (0) target = $region41
    $region40: #{tpu_custom_call.1} parent=1 // pred_region
      %99 = dma.done [#allocation9], 7168
    $region41: #{tpu_custom_call.1} parent=1 // pred_fallthru
      _
    // Predicated region
    $region42: #{tpu_custom_call.1} parent=1 // pred_check
      _
    $region43: #{tpu_custom_call.1} parent=1 // pred_check_branch
      %101 = sbr.rel (0) target = $region45
    $region44: #{tpu_custom_call.1} parent=1 // pred_region
      %102 = dma.done [#allocation9], 4096
    $region45: #{tpu_custom_call.1} parent=1 // pred_fallthru
      _
    // Predicated region
    $region46: #{tpu_custom_call.1} parent=1 // pred_check
      _
    $region47: #{tpu_custom_call.1} parent=1 // pred_check_branch
      %104 = sbr.rel (0) target = $region49
    $region48: #{tpu_custom_call.1} parent=1 // pred_region
      %105 = dma.done [#allocation12], 256
    $region49: #{tpu_custom_call.1} parent=1 // pred_fallthru
      _
    %v107 = vld [vmem:[#allocation2] sm:$0xff]
    %v108 = vld [vmem:[#allocation2 + $0x8] sm:$0xff]
    %v109 = vld [vmem:[#allocation2 + $0x10] sm:$0xff]
    %v110 = vld [vmem:[#allocation2 + $0x18] sm:$0xff]
    %v111 = vld [vmem:[#allocation2 + $0x20] sm:$0xff]
    %v112 = vld [vmem:[#allocation2 + $0x28] sm:$0xff]
    %v113 = vld [vmem:[#allocation2 + $0x30] sm:$0xff]
    %v114 = vld [vmem:[#allocation2 + $0x38] sm:$0xff]
    %v115 = vld [vmem:[#allocation2 + $0x40] sm:$0xff]
    %v116 = vld [vmem:[#allocation2 + $0x48] sm:$0xff]
    %v117 = vld [vmem:[#allocation2 + $0x50] sm:$0xff]
    %v118 = vld [vmem:[#allocation2 + $0x58] sm:$0xff]
    %v119 = vld [vmem:[#allocation2 + $0x60] sm:$0xff]
    %v120 = vld [vmem:[#allocation2 + $0x68] sm:$0xff]
    %v121 = vld [vmem:[#allocation2 + $0x70] sm:$0xff]
    %v122 = vld [vmem:[#allocation2 + $0x78] sm:$0xff]
    %s123 = smul.u32 0, 128
    %s124 = sshra.s32 %s123, 3
    %s125 = sand.u32 %s123, 7
    %s126 = smul.addr %s124, 4
    %s127 = scalar_lea.vmem [#allocation7], %s126
    %v128 = vld [vmem:[%s127] sm:$0xf]
    %v129 = vld [vmem:[%s127 + $0x4] sm:$0xf]
    %v130 = vld [vmem:[%s127 + $0x8] sm:$0xf]
    %v131 = vld [vmem:[%s127 + $0xc] sm:$0xf]
    %v132 = vld [vmem:[%s127 + $0x10] sm:$0xf]
    %v133 = vld [vmem:[%s127 + $0x14] sm:$0xf]
    %v134 = vld [vmem:[%s127 + $0x18] sm:$0xf]
    %v135 = vld [vmem:[%s127 + $0x1c] sm:$0xf]
    %v136 = vld [vmem:[%s127 + $0x20] sm:$0xf]
    %v137 = vld [vmem:[%s127 + $0x24] sm:$0xf]
    %v138 = vld [vmem:[%s127 + $0x28] sm:$0xf]
    %v139 = vld [vmem:[%s127 + $0x2c] sm:$0xf]
    %v140 = vld [vmem:[%s127 + $0x30] sm:$0xf]
    %v141 = vld [vmem:[%s127 + $0x34] sm:$0xf]
    %v142 = vld [vmem:[%s127 + $0x38] sm:$0xf]
    %v143 = vld [vmem:[%s127 + $0x3c] sm:$0xf]
    %v144 = vpack.c.bf16 %v108, %v107
    %v145 = vpack.c.bf16 %v110, %v109
    %v146 = vpack.c.bf16 %v112, %v111
    %v147 = vpack.c.bf16 %v114, %v113
    %v148 = vpack.c.bf16 %v116, %v115
    %v149 = vpack.c.bf16 %v118, %v117
    %v150 = vpack.c.bf16 %v120, %v119
    %v151 = vpack.c.bf16 %v122, %v121
    %v152 = vld [vmem:[#allocation8] sm:$0xf]
    %v153 = vld [vmem:[#allocation8 + $0x4] sm:$0xf]
    %v154 = vld [vmem:[#allocation8 + $0x8] sm:$0xf]
    %v155 = vld [vmem:[#allocation8 + $0xc] sm:$0xf]
    %v156 = vld [vmem:[#allocation8 + $0x10] sm:$0xf]
    %v157 = vld [vmem:[#allocation8 + $0x14] sm:$0xf]
    %v158 = vld [vmem:[#allocation8 + $0x18] sm:$0xf]
    %v159 = vld [vmem:[#allocation8 + $0x1c] sm:$0xf]
    %v160 = vld [vmem:[#allocation8 + $0x20] sm:$0xf]
    %v161 = vld [vmem:[#allocation8 + $0x24] sm:$0xf]
    %v162 = vld [vmem:[#allocation8 + $0x28] sm:$0xf]
    %v163 = vld [vmem:[#allocation8 + $0x2c] sm:$0xf]
    %v164 = vld [vmem:[#allocation8 + $0x30] sm:$0xf]
    %v165 = vld [vmem:[#allocation8 + $0x34] sm:$0xf]
    %v166 = vld [vmem:[#allocation8 + $0x38] sm:$0xf]
    %v167 = vld [vmem:[#allocation8 + $0x3c] sm:$0xf]
    %v168 = vld [vmem:[#allocation11] sm:$0x1]
    %v169 = vlaneseq
    %v170 = vshrl.u32 %v169, 7
    %v171 = vsub.s32 0, %v170
    %v172 = vrot.slane %v168, %v171
    %v189 = vunpack.c.l.b16 %v152
    %v190 = vunpack.c.l.b16 %v153
    %v191 = vunpack.c.l.b16 %v154
    %v192 = vunpack.c.l.b16 %v155
    %v193 = vunpack.c.l.b16 %v156
    %v194 = vunpack.c.l.b16 %v157
    %v195 = vunpack.c.l.b16 %v158
    %v196 = vunpack.c.l.b16 %v159
    %v197 = vunpack.c.l.b16 %v160
    %v198 = vunpack.c.l.b16 %v161
    %v199 = vunpack.c.l.b16 %v162
    %v200 = vunpack.c.l.b16 %v163
    %v201 = vunpack.c.l.b16 %v164
    %v202 = vunpack.c.l.b16 %v165
    %v203 = vunpack.c.l.b16 %v166
    %v204 = vunpack.c.l.b16 %v167
    %v205 = vpack.c.b16 %v190, %v189
    %v206 = vpack.c.b16 %v192, %v191
    %v207 = vpack.c.b16 %v194, %v193
    %v208 = vpack.c.b16 %v196, %v195
    %v209 = vpack.c.b16 %v198, %v197
    %v210 = vpack.c.b16 %v200, %v199
    %v211 = vpack.c.b16 %v202, %v201
    %v212 = vpack.c.b16 %v204, %v203
    %221 = vmatprep.subr.bf16.mxu0 0
    %222 = vmatpush1.bf16.msra.mxu0 %v212
    %223 = vmatprep.subr.bf16.mxu0 0
    %224 = vmatpush1.bf16.msra.mxu0 %v211
    %225 = vmatprep.subr.bf16.mxu0 0
    %226 = vmatpush1.bf16.msra.mxu0 %v210
    %227 = vmatprep.subr.bf16.mxu0 0
    %228 = vmatpush1.bf16.msra.mxu0 %v209
    %229 = vmatprep.subr.bf16.mxu0 0
    %230 = vmatpush1.bf16.msra.mxu0 %v208
    %231 = vmatprep.subr.bf16.mxu0 0
    %232 = vmatpush1.bf16.msra.mxu0 %v207
    %233 = vmatprep.subr.bf16.mxu0 0
    %234 = vmatpush1.bf16.msra.mxu0 %v206
    %235 = vmatprep.subr.bf16.mxu0 0
    %236 = vmatpush1.bf16.msra.mxu0 %v205
    %237 = vmatprep.subr.bf16.mxu0 0
    %238 = vmatpush2.bf16.msra.mxu0 0
    %239 = vmatprep.subr.bf16.mxu0 0
    %240 = vmatpush2.bf16.msra.mxu0 0
    %241 = vmatprep.subr.bf16.mxu0 0
    %242 = vmatpush2.bf16.msra.mxu0 0
    %243 = vmatprep.subr.bf16.mxu0 0
    %244 = vmatpush2.bf16.msra.mxu0 0
    %245 = vmatprep.subr.bf16.mxu0 0
    %246 = vmatpush2.bf16.msra.mxu0 0
    %247 = vmatprep.subr.bf16.mxu0 0
    %248 = vmatpush2.bf16.msra.mxu0 0
    %249 = vmatprep.subr.bf16.mxu0 0
    %250 = vmatpush2.bf16.msra.mxu0 0
    %251 = vmatprep.subr.bf16.mxu0 0
    %252 = vmatpush2.bf16.msra.mxu0 0
    %253 = vmatprep.mubr.bf16.mxu0 0
    %254 = vmatmul.mubr.bf16.gmra.mxu0 %v144
    %v255 = vpop.f32.mrf.mxu0
    %v256 = vadd.f32 %v172, %v255
    %v257 = vpop.f32.mrf.mxu0
    %v258 = vpop.f32.mrf.mxu0
    %v259 = vadd.f32 %v172, %v258
    %v260 = vpop.f32.mrf.mxu0
    %261 = vmatprep.mubr.bf16.mxu0 0
    %262 = vmatmul.mubr.bf16.gmra.mxu0 %v145
    %v263 = vpop.f32.mrf.mxu0
    %v264 = vadd.f32 %v172, %v263
    %v265 = vpop.f32.mrf.mxu0
    %v266 = vpop.f32.mrf.mxu0
    %v267 = vadd.f32 %v172, %v266
    %v268 = vpop.f32.mrf.mxu0
    %269 = vmatprep.mubr.bf16.mxu0 0
    %270 = vmatmul.mubr.bf16.gmra.mxu0 %v146
    %v271 = vpop.f32.mrf.mxu0
    %v272 = vadd.f32 %v172, %v271
    %v273 = vpop.f32.mrf.mxu0
    %v274 = vpop.f32.mrf.mxu0
    %v275 = vadd.f32 %v172, %v274
    %v276 = vpop.f32.mrf.mxu0
    %277 = vmatprep.mubr.bf16.mxu0 0
    %278 = vmatmul.mubr.bf16.gmra.mxu0 %v147
    %v279 = vpop.f32.mrf.mxu0
    %v280 = vadd.f32 %v172, %v279
    %v281 = vpop.f32.mrf.mxu0
    %v282 = vpop.f32.mrf.mxu0
    %v283 = vadd.f32 %v172, %v282
    %v284 = vpop.f32.mrf.mxu0
    %285 = vmatprep.mubr.bf16.mxu0 0
    %286 = vmatmul.mubr.bf16.gmra.mxu0 %v148
    %v287 = vpop.f32.mrf.mxu0
    %v288 = vadd.f32 %v172, %v287
    %v289 = vpop.f32.mrf.mxu0
    %v290 = vpop.f32.mrf.mxu0
    %v291 = vadd.f32 %v172, %v290
    %v292 = vpop.f32.mrf.mxu0
    %293 = vmatprep.mubr.bf16.mxu0 0
    %294 = vmatmul.mubr.bf16.gmra.mxu0 %v149
    %v295 = vpop.f32.mrf.mxu0
    %v296 = vadd.f32 %v172, %v295
    %v297 = vpop.f32.mrf.mxu0
    %v298 = vpop.f32.mrf.mxu0
    %v299 = vadd.f32 %v172, %v298
    %v300 = vpop.f32.mrf.mxu0
    %301 = vmatprep.mubr.bf16.mxu0 0
    %302 = vmatmul.mubr.bf16.gmra.mxu0 %v150
    %v303 = vpop.f32.mrf.mxu0
    %v304 = vadd.f32 %v172, %v303
    %v305 = vpop.f32.mrf.mxu0
    %v306 = vpop.f32.mrf.mxu0
    %v307 = vadd.f32 %v172, %v306
    %v308 = vpop.f32.mrf.mxu0
    %309 = vmatprep.mubr.bf16.mxu0 0
    %310 = vmatmul.mubr.bf16.gmra.mxu0 %v151
    %v311 = vpop.f32.mrf.mxu0
    %v312 = vadd.f32 %v172, %v311
    %v313 = vpop.f32.mrf.mxu0
    %v314 = vpop.f32.mrf.mxu0
    %v315 = vadd.f32 %v172, %v314
    %v316 = vpop.f32.mrf.mxu0
    %317 = vdwg.mxu0
    %v318 = vxor.u32 %v256, 2147483648
    %v319 = vxor.u32 %v259, 2147483648
    %v320 = vxor.u32 %v264, 2147483648
    %v321 = vxor.u32 %v267, 2147483648
    %v322 = vxor.u32 %v272, 2147483648
    %v323 = vxor.u32 %v275, 2147483648
    %v324 = vxor.u32 %v280, 2147483648
    %v325 = vxor.u32 %v283, 2147483648
    %v326 = vxor.u32 %v288, 2147483648
    %v327 = vxor.u32 %v291, 2147483648
    %v328 = vxor.u32 %v296, 2147483648
    %v329 = vxor.u32 %v299, 2147483648
    %v330 = vxor.u32 %v304, 2147483648
    %v331 = vxor.u32 %v307, 2147483648
    %v332 = vxor.u32 %v312, 2147483648
    %v333 = vxor.u32 %v315, 2147483648
    %v334 = vmul.f32 %v318, 1.442695
    %v335 = vpow.pop %v334
    %v336 = vmul.f32 %v319, 1.442695
    %v337 = vpow.pop %v336
    %v338 = vmul.f32 %v320, 1.442695
    %v339 = vpow.pop %v338
    %v340 = vmul.f32 %v321, 1.442695
    %v341 = vpow.pop %v340
    %v342 = vmul.f32 %v322, 1.442695
    %v343 = vpow.pop %v342
    %v344 = vmul.f32 %v323, 1.442695
    %v345 = vpow.pop %v344
    %v346 = vmul.f32 %v324, 1.442695
    %v347 = vpow.pop %v346
    %v348 = vmul.f32 %v325, 1.442695
    %v349 = vpow.pop %v348
    %v350 = vmul.f32 %v326, 1.442695
    %v351 = vpow.pop %v350
    %v352 = vmul.f32 %v327, 1.442695
    %v353 = vpow.pop %v352
    %v354 = vmul.f32 %v328, 1.442695
    %v355 = vpow.pop %v354
    %v356 = vmul.f32 %v329, 1.442695
    %v357 = vpow.pop %v356
    %v358 = vmul.f32 %v330, 1.442695
    %v359 = vpow.pop %v358
    %v360 = vmul.f32 %v331, 1.442695
    %v361 = vpow.pop %v360
    %v362 = vmul.f32 %v332, 1.442695
    %v363 = vpow.pop %v362
    %v364 = vmul.f32 %v333, 1.442695
    %v365 = vpow.pop %v364
    %v366 = vadd.f32 %v335, 1.0
    %v367 = vadd.f32 %v337, 1.0
    %v368 = vadd.f32 %v339, 1.0
    %v369 = vadd.f32 %v341, 1.0
    %v370 = vadd.f32 %v343, 1.0
    %v371 = vadd.f32 %v345, 1.0
    %v372 = vadd.f32 %v347, 1.0
    %v373 = vadd.f32 %v349, 1.0
    %v374 = vadd.f32 %v351, 1.0
    %v375 = vadd.f32 %v353, 1.0
    %v376 = vadd.f32 %v355, 1.0
    %v377 = vadd.f32 %v357, 1.0
    %v378 = vadd.f32 %v359, 1.0
    %v379 = vadd.f32 %v361, 1.0
    %v380 = vadd.f32 %v363, 1.0
    %v381 = vadd.f32 %v365, 1.0
    %v382 = vrcp.pop %v366
    %v383 = vmul.f32 1.0, %v382
    %v384 = vrcp.pop %v367
    %v385 = vmul.f32 1.0, %v384
    %v386 = vrcp.pop %v368
    %v387 = vmul.f32 1.0, %v386
    %v388 = vrcp.pop %v369
    %v389 = vmul.f32 1.0, %v388
    %v390 = vrcp.pop %v370
    %v391 = vmul.f32 1.0, %v390
    %v392 = vrcp.pop %v371
    %v393 = vmul.f32 1.0, %v392
    %v394 = vrcp.pop %v372
    %v395 = vmul.f32 1.0, %v394
    %v396 = vrcp.pop %v373
    %v397 = vmul.f32 1.0, %v396
    %v398 = vrcp.pop %v374
    %v399 = vmul.f32 1.0, %v398
    %v400 = vrcp.pop %v375
    %v401 = vmul.f32 1.0, %v400
    %v402 = vrcp.pop %v376
    %v403 = vmul.f32 1.0, %v402
    %v404 = vrcp.pop %v377
    %v405 = vmul.f32 1.0, %v404
    %v406 = vrcp.pop %v378
    %v407 = vmul.f32 1.0, %v406
    %v408 = vrcp.pop %v379
    %v409 = vmul.f32 1.0, %v408
    %v410 = vrcp.pop %v380
    %v411 = vmul.f32 1.0, %v410
    %v412 = vrcp.pop %v381
    %v413 = vmul.f32 1.0, %v412
    %v414 = vmul.f32 %v256, %v383
    %v415 = vmul.f32 %v259, %v385
    %v416 = vmul.f32 %v264, %v387
    %v417 = vmul.f32 %v267, %v389
    %v418 = vmul.f32 %v272, %v391
    %v419 = vmul.f32 %v275, %v393
    %v420 = vmul.f32 %v280, %v395
    %v421 = vmul.f32 %v283, %v397
    %v422 = vmul.f32 %v288, %v399
    %v423 = vmul.f32 %v291, %v401
    %v424 = vmul.f32 %v296, %v403
    %v425 = vmul.f32 %v299, %v405
    %v426 = vmul.f32 %v304, %v407
    %v427 = vmul.f32 %v307, %v409
    %v428 = vmul.f32 %v312, %v411
    %v429 = vmul.f32 %v315, %v413
    %v430 = vpack.c.bf16 %v415, %v414
    %v431 = vpack.c.bf16 %v417, %v416
    %v432 = vpack.c.bf16 %v419, %v418
    %v433 = vpack.c.bf16 %v421, %v420
    %v434 = vpack.c.bf16 %v423, %v422
    %v435 = vpack.c.bf16 %v425, %v424
    %v436 = vpack.c.bf16 %v427, %v426
    %v437 = vpack.c.bf16 %v429, %v428
    %s438 = scalar_lea.vmem [#allocation8], 64
    %v439 = vld [vmem:[%s438] sm:$0xf]
    %v440 = vld [vmem:[%s438 + $0x4] sm:$0xf]
    %v441 = vld [vmem:[%s438 + $0x8] sm:$0xf]
    %v442 = vld [vmem:[%s438 + $0xc] sm:$0xf]
    %v443 = vld [vmem:[%s438 + $0x10] sm:$0xf]
    %v444 = vld [vmem:[%s438 + $0x14] sm:$0xf]
    %v445 = vld [vmem:[%s438 + $0x18] sm:$0xf]
    %v446 = vld [vmem:[%s438 + $0x1c] sm:$0xf]
    %v447 = vld [vmem:[%s438 + $0x20] sm:$0xf]
    %v448 = vld [vmem:[%s438 + $0x24] sm:$0xf]
    %v449 = vld [vmem:[%s438 + $0x28] sm:$0xf]
    %v450 = vld [vmem:[%s438 + $0x2c] sm:$0xf]
    %v451 = vld [vmem:[%s438 + $0x30] sm:$0xf]
    %v452 = vld [vmem:[%s438 + $0x34] sm:$0xf]
    %v453 = vld [vmem:[%s438 + $0x38] sm:$0xf]
    %v454 = vld [vmem:[%s438 + $0x3c] sm:$0xf]
    %v455 = vld [vmem:[#allocation11 + $0x1] sm:$0x1]
    %v456 = vlaneseq
    %v457 = vshrl.u32 %v456, 7
    %v458 = vsub.s32 0, %v457
    %v459 = vrot.slane %v455, %v458
    %v476 = vunpack.c.l.b16 %v439
    %v477 = vunpack.c.l.b16 %v440
    %v478 = vunpack.c.l.b16 %v441
    %v479 = vunpack.c.l.b16 %v442
    %v480 = vunpack.c.l.b16 %v443
    %v481 = vunpack.c.l.b16 %v444
    %v482 = vunpack.c.l.b16 %v445
    %v483 = vunpack.c.l.b16 %v446
    %v484 = vunpack.c.l.b16 %v447
    %v485 = vunpack.c.l.b16 %v448
    %v486 = vunpack.c.l.b16 %v449
    %v487 = vunpack.c.l.b16 %v450
    %v488 = vunpack.c.l.b16 %v451
    %v489 = vunpack.c.l.b16 %v452
    %v490 = vunpack.c.l.b16 %v453
    %v491 = vunpack.c.l.b16 %v454
    %v492 = vpack.c.b16 %v477, %v476
    %v493 = vpack.c.b16 %v479, %v478
    %v494 = vpack.c.b16 %v481, %v480
    %v495 = vpack.c.b16 %v483, %v482
    %v496 = vpack.c.b16 %v485, %v484
    %v497 = vpack.c.b16 %v487, %v486
    %v498 = vpack.c.b16 %v489, %v488
    %v499 = vpack.c.b16 %v491, %v490
    %508 = vmatprep.subr.bf16.mxu0 0
    %509 = vmatpush1.bf16.msra.mxu0 %v499
    %510 = vmatprep.subr.bf16.mxu0 0
    %511 = vmatpush1.bf16.msra.mxu0 %v498
    %512 = vmatprep.subr.bf16.mxu0 0
    %513 = vmatpush1.bf16.msra.mxu0 %v497
    %514 = vmatprep.subr.bf16.mxu0 0
    %515 = vmatpush1.bf16.msra.mxu0 %v496
    %516 = vmatprep.subr.bf16.mxu0 0
    %517 = vmatpush1.bf16.msra.mxu0 %v495
    %518 = vmatprep.subr.bf16.mxu0 0
    %519 = vmatpush1.bf16.msra.mxu0 %v494
    %520 = vmatprep.subr.bf16.mxu0 0
    %521 = vmatpush1.bf16.msra.mxu0 %v493
    %522 = vmatprep.subr.bf16.mxu0 0
    %523 = vmatpush1.bf16.msra.mxu0 %v492
    %524 = vmatprep.subr.bf16.mxu0 0
    %525 = vmatpush2.bf16.msra.mxu0 0
    %526 = vmatprep.subr.bf16.mxu0 0
    %527 = vmatpush2.bf16.msra.mxu0 0
    %528 = vmatprep.subr.bf16.mxu0 0
    %529 = vmatpush2.bf16.msra.mxu0 0
    %530 = vmatprep.subr.bf16.mxu0 0
    %531 = vmatpush2.bf16.msra.mxu0 0
    %532 = vmatprep.subr.bf16.mxu0 0
    %533 = vmatpush2.bf16.msra.mxu0 0
    %534 = vmatprep.subr.bf16.mxu0 0
    %535 = vmatpush2.bf16.msra.mxu0 0
    %536 = vmatprep.subr.bf16.mxu0 0
    %537 = vmatpush2.bf16.msra.mxu0 0
    %538 = vmatprep.subr.bf16.mxu0 0
    %539 = vmatpush2.bf16.msra.mxu0 0
    %540 = vmatprep.mubr.bf16.mxu0 0
    %541 = vmatmul.mubr.bf16.gmra.mxu0 %v430
    %v542 = vpop.f32.mrf.mxu0
    %v543 = vadd.f32 %v459, %v542
    %v544 = vpop.f32.mrf.mxu0
    %v545 = vpop.f32.mrf.mxu0
    %v546 = vadd.f32 %v459, %v545
    %v547 = vpop.f32.mrf.mxu0
    %548 = vmatprep.mubr.bf16.mxu0 0
    %549 = vmatmul.mubr.bf16.gmra.mxu0 %v431
    %v550 = vpop.f32.mrf.mxu0
    %v551 = vadd.f32 %v459, %v550
    %v552 = vpop.f32.mrf.mxu0
    %v553 = vpop.f32.mrf.mxu0
    %v554 = vadd.f32 %v459, %v553
    %v555 = vpop.f32.mrf.mxu0
    %556 = vmatprep.mubr.bf16.mxu0 0
    %557 = vmatmul.mubr.bf16.gmra.mxu0 %v432
    %v558 = vpop.f32.mrf.mxu0
    %v559 = vadd.f32 %v459, %v558
    %v560 = vpop.f32.mrf.mxu0
    %v561 = vpop.f32.mrf.mxu0
    %v562 = vadd.f32 %v459, %v561
    %v563 = vpop.f32.mrf.mxu0
    %564 = vmatprep.mubr.bf16.mxu0 0
    %565 = vmatmul.mubr.bf16.gmra.mxu0 %v433
    %v566 = vpop.f32.mrf.mxu0
    %v567 = vadd.f32 %v459, %v566
    %v568 = vpop.f32.mrf.mxu0
    %v569 = vpop.f32.mrf.mxu0
    %v570 = vadd.f32 %v459, %v569
    %v571 = vpop.f32.mrf.mxu0
    %572 = vmatprep.mubr.bf16.mxu0 0
    %573 = vmatmul.mubr.bf16.gmra.mxu0 %v434
    %v574 = vpop.f32.mrf.mxu0
    %v575 = vadd.f32 %v459, %v574
    %v576 = vpop.f32.mrf.mxu0
    %v577 = vpop.f32.mrf.mxu0
    %v578 = vadd.f32 %v459, %v577
    %v579 = vpop.f32.mrf.mxu0
    %580 = vmatprep.mubr.bf16.mxu0 0
    %581 = vmatmul.mubr.bf16.gmra.mxu0 %v435
    %v582 = vpop.f32.mrf.mxu0
    %v583 = vadd.f32 %v459, %v582
    %v584 = vpop.f32.mrf.mxu0
    %v585 = vpop.f32.mrf.mxu0
    %v586 = vadd.f32 %v459, %v585
    %v587 = vpop.f32.mrf.mxu0
    %588 = vmatprep.mubr.bf16.mxu0 0
    %589 = vmatmul.mubr.bf16.gmra.mxu0 %v436
    %v590 = vpop.f32.mrf.mxu0
    %v591 = vadd.f32 %v459, %v590
    %v592 = vpop.f32.mrf.mxu0
    %v593 = vpop.f32.mrf.mxu0
    %v594 = vadd.f32 %v459, %v593
    %v595 = vpop.f32.mrf.mxu0
    %596 = vmatprep.mubr.bf16.mxu0 0
    %597 = vmatmul.mubr.bf16.gmra.mxu0 %v437
    %v598 = vpop.f32.mrf.mxu0
    %v599 = vadd.f32 %v459, %v598
    %v600 = vpop.f32.mrf.mxu0
    %v601 = vpop.f32.mrf.mxu0
    %v602 = vadd.f32 %v459, %v601
    %v603 = vpop.f32.mrf.mxu0
    %604 = vdwg.mxu0
    %v605 = vxor.u32 %v543, 2147483648
    %v606 = vxor.u32 %v546, 2147483648
    %v607 = vxor.u32 %v551, 2147483648
    %v608 = vxor.u32 %v554, 2147483648
    %v609 = vxor.u32 %v559, 2147483648
    %v610 = vxor.u32 %v562, 2147483648
    %v611 = vxor.u32 %v567, 2147483648
    %v612 = vxor.u32 %v570, 2147483648
    %v613 = vxor.u32 %v575, 2147483648
    %v614 = vxor.u32 %v578, 2147483648
    %v615 = vxor.u32 %v583, 2147483648
    %v616 = vxor.u32 %v586, 2147483648
    %v617 = vxor.u32 %v591, 2147483648
    %v618 = vxor.u32 %v594, 2147483648
    %v619 = vxor.u32 %v599, 2147483648
    %v620 = vxor.u32 %v602, 2147483648
    %v621 = vmul.f32 %v605, 1.442695
    %v622 = vpow.pop %v621
    %v623 = vmul.f32 %v606, 1.442695
    %v624 = vpow.pop %v623
    %v625 = vmul.f32 %v607, 1.442695
    %v626 = vpow.pop %v625
    %v627 = vmul.f32 %v608, 1.442695
    %v628 = vpow.pop %v627
    %v629 = vmul.f32 %v609, 1.442695
    %v630 = vpow.pop %v629
    %v631 = vmul.f32 %v610, 1.442695
    %v632 = vpow.pop %v631
    %v633 = vmul.f32 %v611, 1.442695
    %v634 = vpow.pop %v633
    %v635 = vmul.f32 %v612, 1.442695
    %v636 = vpow.pop %v635
    %v637 = vmul.f32 %v613, 1.442695
    %v638 = vpow.pop %v637
    %v639 = vmul.f32 %v614, 1.442695
    %v640 = vpow.pop %v639
    %v641 = vmul.f32 %v615, 1.442695
    %v642 = vpow.pop %v641
    %v643 = vmul.f32 %v616, 1.442695
    %v644 = vpow.pop %v643
    %v645 = vmul.f32 %v617, 1.442695
    %v646 = vpow.pop %v645
    %v647 = vmul.f32 %v618, 1.442695
    %v648 = vpow.pop %v647
    %v649 = vmul.f32 %v619, 1.442695
    %v650 = vpow.pop %v649
    %v651 = vmul.f32 %v620, 1.442695
    %v652 = vpow.pop %v651
    %v653 = vadd.f32 %v622, 1.0
    %v654 = vadd.f32 %v624, 1.0
    %v655 = vadd.f32 %v626, 1.0
    %v656 = vadd.f32 %v628, 1.0
    %v657 = vadd.f32 %v630, 1.0
    %v658 = vadd.f32 %v632, 1.0
    %v659 = vadd.f32 %v634, 1.0
    %v660 = vadd.f32 %v636, 1.0
    %v661 = vadd.f32 %v638, 1.0
    %v662 = vadd.f32 %v640, 1.0
    %v663 = vadd.f32 %v642, 1.0
    %v664 = vadd.f32 %v644, 1.0
    %v665 = vadd.f32 %v646, 1.0
    %v666 = vadd.f32 %v648, 1.0
    %v667 = vadd.f32 %v650, 1.0
    %v668 = vadd.f32 %v652, 1.0
    %v669 = vrcp.pop %v653
    %v670 = vmul.f32 1.0, %v669
    %v671 = vrcp.pop %v654
    %v672 = vmul.f32 1.0, %v671
    %v673 = vrcp.pop %v655
    %v674 = vmul.f32 1.0, %v673
    %v675 = vrcp.pop %v656
    %v676 = vmul.f32 1.0, %v675
    %v677 = vrcp.pop %v657
    %v678 = vmul.f32 1.0, %v677
    %v679 = vrcp.pop %v658
    %v680 = vmul.f32 1.0, %v679
    %v681 = vrcp.pop %v659
    %v682 = vmul.f32 1.0, %v681
    %v683 = vrcp.pop %v660
    %v684 = vmul.f32 1.0, %v683
    %v685 = vrcp.pop %v661
    %v686 = vmul.f32 1.0, %v685
    %v687 = vrcp.pop %v662
    %v688 = vmul.f32 1.0, %v687
    %v689 = vrcp.pop %v663
    %v690 = vmul.f32 1.0, %v689
    %v691 = vrcp.pop %v664
    %v692 = vmul.f32 1.0, %v691
    %v693 = vrcp.pop %v665
    %v694 = vmul.f32 1.0, %v693
    %v695 = vrcp.pop %v666
    %v696 = vmul.f32 1.0, %v695
    %v697 = vrcp.pop %v667
    %v698 = vmul.f32 1.0, %v697
    %v699 = vrcp.pop %v668
    %v700 = vmul.f32 1.0, %v699
    %v701 = vmul.f32 %v543, %v670
    %v702 = vmul.f32 %v546, %v672
    %v703 = vmul.f32 %v551, %v674
    %v704 = vmul.f32 %v554, %v676
    %v705 = vmul.f32 %v559, %v678
    %v706 = vmul.f32 %v562, %v680
    %v707 = vmul.f32 %v567, %v682
    %v708 = vmul.f32 %v570, %v684
    %v709 = vmul.f32 %v575, %v686
    %v710 = vmul.f32 %v578, %v688
    %v711 = vmul.f32 %v583, %v690
    %v712 = vmul.f32 %v586, %v692
    %v713 = vmul.f32 %v591, %v694
    %v714 = vmul.f32 %v594, %v696
    %v715 = vmul.f32 %v599, %v698
    %v716 = vmul.f32 %v602, %v700
    %v717 = vpack.c.bf16 %v702, %v701
    %v718 = vpack.c.bf16 %v704, %v703
    %v719 = vpack.c.bf16 %v706, %v705
    %v720 = vpack.c.bf16 %v708, %v707
    %v721 = vpack.c.bf16 %v710, %v709
    %v722 = vpack.c.bf16 %v712, %v711
    %v723 = vpack.c.bf16 %v714, %v713
    %v724 = vpack.c.bf16 %v716, %v715
    %s725 = scalar_lea.vmem [#allocation8], 128
    %v726 = vld [vmem:[%s725] sm:$0xf]
    %v727 = vld [vmem:[%s725 + $0x4] sm:$0xf]
    %v728 = vld [vmem:[%s725 + $0x8] sm:$0xf]
    %v729 = vld [vmem:[%s725 + $0xc] sm:$0xf]
    %v730 = vld [vmem:[%s725 + $0x10] sm:$0xf]
    %v731 = vld [vmem:[%s725 + $0x14] sm:$0xf]
    %v732 = vld [vmem:[%s725 + $0x18] sm:$0xf]
    %v733 = vld [vmem:[%s725 + $0x1c] sm:$0xf]
    %v734 = vld [vmem:[%s725 + $0x20] sm:$0xf]
    %v735 = vld [vmem:[%s725 + $0x24] sm:$0xf]
    %v736 = vld [vmem:[%s725 + $0x28] sm:$0xf]
    %v737 = vld [vmem:[%s725 + $0x2c] sm:$0xf]
    %v738 = vld [vmem:[%s725 + $0x30] sm:$0xf]
    %v739 = vld [vmem:[%s725 + $0x34] sm:$0xf]
    %v740 = vld [vmem:[%s725 + $0x38] sm:$0xf]
    %v741 = vld [vmem:[%s725 + $0x3c] sm:$0xf]
    %v742 = vld [vmem:[#allocation11 + $0x2] sm:$0x1]
    %v743 = vlaneseq
    %v744 = vshrl.u32 %v743, 7
    %v745 = vsub.s32 0, %v744
    %v746 = vrot.slane %v742, %v745
    %v763 = vunpack.c.l.b16 %v726
    %v764 = vunpack.c.l.b16 %v727
    %v765 = vunpack.c.l.b16 %v728
    %v766 = vunpack.c.l.b16 %v729
    %v767 = vunpack.c.l.b16 %v730
    %v768 = vunpack.c.l.b16 %v731
    %v769 = vunpack.c.l.b16 %v732
    %v770 = vunpack.c.l.b16 %v733
    %v771 = vunpack.c.l.b16 %v734
    %v772 = vunpack.c.l.b16 %v735
    %v773 = vunpack.c.l.b16 %v736
    %v774 = vunpack.c.l.b16 %v737
    %v775 = vunpack.c.l.b16 %v738
    %v776 = vunpack.c.l.b16 %v739
    %v777 = vunpack.c.l.b16 %v740
    %v778 = vunpack.c.l.b16 %v741
    %v779 = vpack.c.b16 %v764, %v763
    %v780 = vpack.c.b16 %v766, %v765
    %v781 = vpack.c.b16 %v768, %v767
    %v782 = vpack.c.b16 %v770, %v769
    %v783 = vpack.c.b16 %v772, %v771
    %v784 = vpack.c.b16 %v774, %v773
    %v785 = vpack.c.b16 %v776, %v775
    %v786 = vpack.c.b16 %v778, %v777
    %795 = vmatprep.subr.bf16.mxu0 0
    %796 = vmatpush1.bf16.msra.mxu0 %v786
    %797 = vmatprep.subr.bf16.mxu0 0
    %798 = vmatpush1.bf16.msra.mxu0 %v785
    %799 = vmatprep.subr.bf16.mxu0 0
    %800 = vmatpush1.bf16.msra.mxu0 %v784
    %801 = vmatprep.subr.bf16.mxu0 0
    %802 = vmatpush1.bf16.msra.mxu0 %v783
    %803 = vmatprep.subr.bf16.mxu0 0
    %804 = vmatpush1.bf16.msra.mxu0 %v782
    %805 = vmatprep.subr.bf16.mxu0 0
    %806 = vmatpush1.bf16.msra.mxu0 %v781
    %807 = vmatprep.subr.bf16.mxu0 0
    %808 = vmatpush1.bf16.msra.mxu0 %v780
    %809 = vmatprep.subr.bf16.mxu0 0
    %810 = vmatpush1.bf16.msra.mxu0 %v779
    %811 = vmatprep.subr.bf16.mxu0 0
    %812 = vmatpush2.bf16.msra.mxu0 0
    %813 = vmatprep.subr.bf16.mxu0 0
    %814 = vmatpush2.bf16.msra.mxu0 0
    %815 = vmatprep.subr.bf16.mxu0 0
    %816 = vmatpush2.bf16.msra.mxu0 0
    %817 = vmatprep.subr.bf16.mxu0 0
    %818 = vmatpush2.bf16.msra.mxu0 0
    %819 = vmatprep.subr.bf16.mxu0 0
    %820 = vmatpush2.bf16.msra.mxu0 0
    %821 = vmatprep.subr.bf16.mxu0 0
    %822 = vmatpush2.bf16.msra.mxu0 0
    %823 = vmatprep.subr.bf16.mxu0 0
    %824 = vmatpush2.bf16.msra.mxu0 0
    %825 = vmatprep.subr.bf16.mxu0 0
    %826 = vmatpush2.bf16.msra.mxu0 0
    %827 = vmatprep.mubr.bf16.mxu0 0
    %828 = vmatmul.mubr.bf16.gmra.mxu0 %v717
    %v829 = vpop.f32.mrf.mxu0
    %v830 = vadd.f32 %v746, %v829
    %v831 = vpop.f32.mrf.mxu0
    %v832 = vpop.f32.mrf.mxu0
    %v833 = vadd.f32 %v746, %v832
    %v834 = vpop.f32.mrf.mxu0
    %835 = vmatprep.mubr.bf16.mxu0 0
    %836 = vmatmul.mubr.bf16.gmra.mxu0 %v718
    %v837 = vpop.f32.mrf.mxu0
    %v838 = vadd.f32 %v746, %v837
    %v839 = vpop.f32.mrf.mxu0
    %v840 = vpop.f32.mrf.mxu0
    %v841 = vadd.f32 %v746, %v840
    %v842 = vpop.f32.mrf.mxu0
    %843 = vmatprep.mubr.bf16.mxu0 0
    %844 = vmatmul.mubr.bf16.gmra.mxu0 %v719
    %v845 = vpop.f32.mrf.mxu0
    %v846 = vadd.f32 %v746, %v845
    %v847 = vpop.f32.mrf.mxu0
    %v848 = vpop.f32.mrf.mxu0
    %v849 = vadd.f32 %v746, %v848
    %v850 = vpop.f32.mrf.mxu0
    %851 = vmatprep.mubr.bf16.mxu0 0
    %852 = vmatmul.mubr.bf16.gmra.mxu0 %v720
    %v853 = vpop.f32.mrf.mxu0
    %v854 = vadd.f32 %v746, %v853
    %v855 = vpop.f32.mrf.mxu0
    %v856 = vpop.f32.mrf.mxu0
    %v857 = vadd.f32 %v746, %v856
    %v858 = vpop.f32.mrf.mxu0
    %859 = vmatprep.mubr.bf16.mxu0 0
    %860 = vmatmul.mubr.bf16.gmra.mxu0 %v721
    %v861 = vpop.f32.mrf.mxu0
    %v862 = vadd.f32 %v746, %v861
    %v863 = vpop.f32.mrf.mxu0
    %v864 = vpop.f32.mrf.mxu0
    %v865 = vadd.f32 %v746, %v864
    %v866 = vpop.f32.mrf.mxu0
    %867 = vmatprep.mubr.bf16.mxu0 0
    %868 = vmatmul.mubr.bf16.gmra.mxu0 %v722
    %v869 = vpop.f32.mrf.mxu0
    %v870 = vadd.f32 %v746, %v869
    %v871 = vpop.f32.mrf.mxu0
    %v872 = vpop.f32.mrf.mxu0
    %v873 = vadd.f32 %v746, %v872
    %v874 = vpop.f32.mrf.mxu0
    %875 = vmatprep.mubr.bf16.mxu0 0
    %876 = vmatmul.mubr.bf16.gmra.mxu0 %v723
    %v877 = vpop.f32.mrf.mxu0
    %v878 = vadd.f32 %v746, %v877
    %v879 = vpop.f32.mrf.mxu0
    %v880 = vpop.f32.mrf.mxu0
    %v881 = vadd.f32 %v746, %v880
    %v882 = vpop.f32.mrf.mxu0
    %883 = vmatprep.mubr.bf16.mxu0 0
    %884 = vmatmul.mubr.bf16.gmra.mxu0 %v724
    %v885 = vpop.f32.mrf.mxu0
    %v886 = vadd.f32 %v746, %v885
    %v887 = vpop.f32.mrf.mxu0
    %v888 = vpop.f32.mrf.mxu0
    %v889 = vadd.f32 %v746, %v888
    %v890 = vpop.f32.mrf.mxu0
    %891 = vdwg.mxu0
    %v892 = vld [vmem:[#allocation5] sm:$0xf]
    %v893 = vld [vmem:[#allocation5 + $0x4] sm:$0xf]
    %v894 = vld [vmem:[#allocation5 + $0x8] sm:$0xf]
    %v895 = vld [vmem:[#allocation5 + $0xc] sm:$0xf]
    %v896 = vld [vmem:[#allocation5 + $0x10] sm:$0xf]
    %v897 = vld [vmem:[#allocation5 + $0x14] sm:$0xf]
    %v898 = vld [vmem:[#allocation5 + $0x18] sm:$0xf]
    %v899 = vld [vmem:[#allocation5 + $0x1c] sm:$0xf]
    %v900 = vld [vmem:[#allocation5 + $0x20] sm:$0xf]
    %v901 = vld [vmem:[#allocation5 + $0x24] sm:$0xf]
    %v902 = vld [vmem:[#allocation5 + $0x28] sm:$0xf]
    %v903 = vld [vmem:[#allocation5 + $0x2c] sm:$0xf]
    %v904 = vld [vmem:[#allocation5 + $0x30] sm:$0xf]
    %v905 = vld [vmem:[#allocation5 + $0x34] sm:$0xf]
    %v906 = vld [vmem:[#allocation5 + $0x38] sm:$0xf]
    %v907 = vld [vmem:[#allocation5 + $0x3c] sm:$0xf]
    %v908 = vld [vmem:[#allocation7] sm:$0xf]
    %v909 = vld [vmem:[#allocation7 + $0x4] sm:$0xf]
    %v910 = vld [vmem:[#allocation7 + $0x8] sm:$0xf]
    %v911 = vld [vmem:[#allocation7 + $0xc] sm:$0xf]
    %v912 = vld [vmem:[#allocation7 + $0x10] sm:$0xf]
    %v913 = vld [vmem:[#allocation7 + $0x14] sm:$0xf]
    %v914 = vld [vmem:[#allocation7 + $0x18] sm:$0xf]
    %v915 = vld [vmem:[#allocation7 + $0x1c] sm:$0xf]
    %v916 = vld [vmem:[#allocation7 + $0x20] sm:$0xf]
    %v917 = vld [vmem:[#allocation7 + $0x24] sm:$0xf]
    %v918 = vld [vmem:[#allocation7 + $0x28] sm:$0xf]
    %v919 = vld [vmem:[#allocation7 + $0x2c] sm:$0xf]
    %v920 = vld [vmem:[#allocation7 + $0x30] sm:$0xf]
    %v921 = vld [vmem:[#allocation7 + $0x34] sm:$0xf]
    %v922 = vld [vmem:[#allocation7 + $0x38] sm:$0xf]
    %v923 = vld [vmem:[#allocation7 + $0x3c] sm:$0xf]
    %v940 = vunpack.c.l.b16 %v892
    %v941 = vunpack.c.l.b16 %v893
    %v942 = vunpack.c.l.b16 %v894
    %v943 = vunpack.c.l.b16 %v895
    %v944 = vunpack.c.l.b16 %v896
    %v945 = vunpack.c.l.b16 %v897
    %v946 = vunpack.c.l.b16 %v898
    %v947 = vunpack.c.l.b16 %v899
    %v948 = vunpack.c.l.b16 %v900
    %v949 = vunpack.c.l.b16 %v901
    %v950 = vunpack.c.l.b16 %v902
    %v951 = vunpack.c.l.b16 %v903
    %v952 = vunpack.c.l.b16 %v904
    %v953 = vunpack.c.l.b16 %v905
    %v954 = vunpack.c.l.b16 %v906
    %v955 = vunpack.c.l.b16 %v907
    %v956 = vpack.c.b16 %v941, %v940
    %v957 = vpack.c.b16 %v943, %v942
    %v958 = vpack.c.b16 %v945, %v944
    %v959 = vpack.c.b16 %v947, %v946
    %v960 = vpack.c.b16 %v949, %v948
    %v961 = vpack.c.b16 %v951, %v950
    %v962 = vpack.c.b16 %v953, %v952
    %v963 = vpack.c.b16 %v955, %v954
    %v988 = vunpack.c.l.b16 %v908
    %v989 = vunpack.c.l.b16 %v909
    %v990 = vunpack.c.l.b16 %v910
    %v991 = vunpack.c.l.b16 %v911
    %v992 = vunpack.c.l.b16 %v912
    %v993 = vunpack.c.l.b16 %v913
    %v994 = vunpack.c.l.b16 %v914
    %v995 = vunpack.c.l.b16 %v915
    %v996 = vunpack.c.l.b16 %v916
    %v997 = vunpack.c.l.b16 %v917
    %v998 = vunpack.c.l.b16 %v918
    %v999 = vunpack.c.l.b16 %v919
    %v1000 = vunpack.c.l.b16 %v920
    %v1001 = vunpack.c.l.b16 %v921
    %v1002 = vunpack.c.l.b16 %v922
    %v1003 = vunpack.c.l.b16 %v923
    %v1004 = vpack.c.b16 %v989, %v988
    %v1005 = vpack.c.b16 %v991, %v990
    %v1006 = vpack.c.b16 %v993, %v992
    %v1007 = vpack.c.b16 %v995, %v994
    %v1008 = vpack.c.b16 %v997, %v996
    %v1009 = vpack.c.b16 %v999, %v998
    %v1010 = vpack.c.b16 %v1001, %v1000
    %v1011 = vpack.c.b16 %v1003, %v1002
    %1020 = vmatprep.subr.bf16.mxu0 0
    %1021 = vmatpush1.bf16.msra.mxu0 %v1011
    %1022 = vmatprep.subr.bf16.mxu0 0
    %1023 = vmatpush1.bf16.msra.mxu0 %v1010
    %1024 = vmatprep.subr.bf16.mxu0 0
    %1025 = vmatpush1.bf16.msra.mxu0 %v1009
    %1026 = vmatprep.subr.bf16.mxu0 0
    %1027 = vmatpush1.bf16.msra.mxu0 %v1008
    %1028 = vmatprep.subr.bf16.mxu0 0
    %1029 = vmatpush1.bf16.msra.mxu0 %v1007
    %1030 = vmatprep.subr.bf16.mxu0 0
    %1031 = vmatpush1.bf16.msra.mxu0 %v1006
    %1032 = vmatprep.subr.bf16.mxu0 0
    %1033 = vmatpush1.bf16.msra.mxu0 %v1005
    %1034 = vmatprep.subr.bf16.mxu0 0
    %1035 = vmatpush1.bf16.msra.mxu0 %v1004
    %1036 = vmatprep.subr.bf16.mxu0 0
    %1037 = vmatpush2.bf16.msra.mxu0 0
    %1038 = vmatprep.subr.bf16.mxu0 0
    %1039 = vmatpush2.bf16.msra.mxu0 0
    %1040 = vmatprep.subr.bf16.mxu0 0
    %1041 = vmatpush2.bf16.msra.mxu0 0
    %1042 = vmatprep.subr.bf16.mxu0 0
    %1043 = vmatpush2.bf16.msra.mxu0 0
    %1044 = vmatprep.subr.bf16.mxu0 0
    %1045 = vmatpush2.bf16.msra.mxu0 0
    %1046 = vmatprep.subr.bf16.mxu0 0
    %1047 = vmatpush2.bf16.msra.mxu0 0
    %1048 = vmatprep.subr.bf16.mxu0 0
    %1049 = vmatpush2.bf16.msra.mxu0 0
    %1050 = vmatprep.subr.bf16.mxu0 0
    %1051 = vmatpush2.bf16.msra.mxu0 0
    %1052 = vmatprep.mubr.bf16.mxu0 0
    %1053 = vmatmul.mubr.bf16.gmra.mxu0 %v956
    %v1054 = vpop.f32.mrf.mxu0
    %v1055 = vadd.f32 0.0, %v1054
    %v1056 = vpop.f32.mrf.mxu0
    %v1057 = vpop.f32.mrf.mxu0
    %v1058 = vadd.f32 0.0, %v1057
    %v1059 = vpop.f32.mrf.mxu0
    %1060 = vmatprep.mubr.bf16.mxu0 0
    %1061 = vmatmul.mubr.bf16.gmra.mxu0 %v957
    %v1062 = vpop.f32.mrf.mxu0
    %v1063 = vadd.f32 0.0, %v1062
    %v1064 = vpop.f32.mrf.mxu0
    %v1065 = vpop.f32.mrf.mxu0
    %v1066 = vadd.f32 0.0, %v1065
    %v1067 = vpop.f32.mrf.mxu0
    %1068 = vmatprep.mubr.bf16.mxu0 0
    %1069 = vmatmul.mubr.bf16.gmra.mxu0 %v958
    %v1070 = vpop.f32.mrf.mxu0
    %v1071 = vadd.f32 0.0, %v1070
    %v1072 = vpop.f32.mrf.mxu0
    %v1073 = vpop.f32.mrf.mxu0
    %v1074 = vadd.f32 0.0, %v1073
    %v1075 = vpop.f32.mrf.mxu0
    %1076 = vmatprep.mubr.bf16.mxu0 0
    %1077 = vmatmul.mubr.bf16.gmra.mxu0 %v959
    %v1078 = vpop.f32.mrf.mxu0
    %v1079 = vadd.f32 0.0, %v1078
    %v1080 = vpop.f32.mrf.mxu0
    %v1081 = vpop.f32.mrf.mxu0
    %v1082 = vadd.f32 0.0, %v1081
    %v1083 = vpop.f32.mrf.mxu0
    %1084 = vmatprep.mubr.bf16.mxu0 0
    %1085 = vmatmul.mubr.bf16.gmra.mxu0 %v960
    %v1086 = vpop.f32.mrf.mxu0
    %v1087 = vadd.f32 0.0, %v1086
    %v1088 = vpop.f32.mrf.mxu0
    %v1089 = vpop.f32.mrf.mxu0
    %v1090 = vadd.f32 0.0, %v1089
    %v1091 = vpop.f32.mrf.mxu0
    %1092 = vmatprep.mubr.bf16.mxu0 0
    %1093 = vmatmul.mubr.bf16.gmra.mxu0 %v961
    %v1094 = vpop.f32.mrf.mxu0
    %v1095 = vadd.f32 0.0, %v1094
    %v1096 = vpop.f32.mrf.mxu0
    %v1097 = vpop.f32.mrf.mxu0
    %v1098 = vadd.f32 0.0, %v1097
    %v1099 = vpop.f32.mrf.mxu0
    %1100 = vmatprep.mubr.bf16.mxu0 0
    %1101 = vmatmul.mubr.bf16.gmra.mxu0 %v962
    %v1102 = vpop.f32.mrf.mxu0
    %v1103 = vadd.f32 0.0, %v1102
    %v1104 = vpop.f32.mrf.mxu0
    %v1105 = vpop.f32.mrf.mxu0
    %v1106 = vadd.f32 0.0, %v1105
    %v1107 = vpop.f32.mrf.mxu0
    %1108 = vmatprep.mubr.bf16.mxu0 0
    %1109 = vmatmul.mubr.bf16.gmra.mxu0 %v963
    %v1110 = vpop.f32.mrf.mxu0
    %v1111 = vadd.f32 0.0, %v1110
    %v1112 = vpop.f32.mrf.mxu0
    %v1113 = vpop.f32.mrf.mxu0
    %v1114 = vadd.f32 0.0, %v1113
    %v1115 = vpop.f32.mrf.mxu0
    %1116 = vdwg.mxu0
    %v1117 = vpack.c.bf16 %v1058, %v1055
    %v1118 = vpack.c.bf16 %v1066, %v1063
    %v1119 = vpack.c.bf16 %v1074, %v1071
    %v1120 = vpack.c.bf16 %v1082, %v1079
    %v1121 = vpack.c.bf16 %v1090, %v1087
    %v1122 = vpack.c.bf16 %v1098, %v1095
    %v1123 = vpack.c.bf16 %v1106, %v1103
    %v1124 = vpack.c.bf16 %v1114, %v1111
    %v1141 = vunpack.c.l.b16 %v128
    %v1142 = vunpack.c.l.b16 %v129
    %v1143 = vunpack.c.l.b16 %v130
    %v1144 = vunpack.c.l.b16 %v131
    %v1145 = vunpack.c.l.b16 %v132
    %v1146 = vunpack.c.l.b16 %v133
    %v1147 = vunpack.c.l.b16 %v134
    %v1148 = vunpack.c.l.b16 %v135
    %v1149 = vunpack.c.l.b16 %v136
    %v1150 = vunpack.c.l.b16 %v137
    %v1151 = vunpack.c.l.b16 %v138
    %v1152 = vunpack.c.l.b16 %v139
    %v1153 = vunpack.c.l.b16 %v140
    %v1154 = vunpack.c.l.b16 %v141
    %v1155 = vunpack.c.l.b16 %v142
    %v1156 = vunpack.c.l.b16 %v143
    %v1157 = vpack.c.b16 %v1142, %v1141
    %v1158 = vpack.c.b16 %v1144, %v1143
    %v1159 = vpack.c.b16 %v1146, %v1145
    %v1160 = vpack.c.b16 %v1148, %v1147
    %v1161 = vpack.c.b16 %v1150, %v1149
    %v1162 = vpack.c.b16 %v1152, %v1151
    %v1163 = vpack.c.b16 %v1154, %v1153
    %v1164 = vpack.c.b16 %v1156, %v1155
    %v1173 = vld [vmem:[#allocation10] sm:$0xf]
    %v1174 = vld [vmem:[#allocation10 + $0x4] sm:$0xf]
    %v1175 = vld [vmem:[#allocation10 + $0x8] sm:$0xf]
    %v1176 = vld [vmem:[#allocation10 + $0xc] sm:$0xf]
    %v1177 = vld [vmem:[#allocation10 + $0x10] sm:$0xf]
    %v1178 = vld [vmem:[#allocation10 + $0x14] sm:$0xf]
    %v1179 = vld [vmem:[#allocation10 + $0x18] sm:$0xf]
    %v1180 = vld [vmem:[#allocation10 + $0x1c] sm:$0xf]
    %v1181 = vld [vmem:[#allocation10 + $0x20] sm:$0xf]
    %v1182 = vld [vmem:[#allocation10 + $0x24] sm:$0xf]
    %v1183 = vld [vmem:[#allocation10 + $0x28] sm:$0xf]
    %v1184 = vld [vmem:[#allocation10 + $0x2c] sm:$0xf]
    %v1185 = vld [vmem:[#allocation10 + $0x30] sm:$0xf]
    %v1186 = vld [vmem:[#allocation10 + $0x34] sm:$0xf]
    %v1187 = vld [vmem:[#allocation10 + $0x38] sm:$0xf]
    %v1188 = vld [vmem:[#allocation10 + $0x3c] sm:$0xf]
    %v1189 = vld [vmem:[#allocation10 + $0x40] sm:$0xf]
    %v1190 = vld [vmem:[#allocation10 + $0x44] sm:$0xf]
    %v1191 = vld [vmem:[#allocation10 + $0x48] sm:$0xf]
    %v1192 = vld [vmem:[#allocation10 + $0x4c] sm:$0xf]
    %v1193 = vld [vmem:[#allocation10 + $0x50] sm:$0xf]
    %v1194 = vld [vmem:[#allocation10 + $0x54] sm:$0xf]
    %v1195 = vld [vmem:[#allocation10 + $0x58] sm:$0xf]
    %v1196 = vld [vmem:[#allocation10 + $0x5c] sm:$0xf]
    %v1197 = vld [vmem:[#allocation10 + $0x60] sm:$0xf]
    %v1198 = vld [vmem:[#allocation10 + $0x64] sm:$0xf]
    %v1199 = vld [vmem:[#allocation10 + $0x68] sm:$0xf]
    %v1200 = vld [vmem:[#allocation10 + $0x6c] sm:$0xf]
    %v1201 = vld [vmem:[#allocation10 + $0x70] sm:$0xf]
    %v1202 = vld [vmem:[#allocation10 + $0x74] sm:$0xf]
    %v1203 = vld [vmem:[#allocation10 + $0x78] sm:$0xf]
    %v1204 = vld [vmem:[#allocation10 + $0x7c] sm:$0xf]
    %v1205 = vld [vmem:[#allocation11 + $0x3] sm:$0x1]
    %v1206 = vlaneseq
    %v1207 = vshrl.u32 %v1206, 7
    %v1208 = vsub.s32 0, %v1207
    %v1209 = vrot.slane %v1205, %v1208
    %v1242 = vunpack.c.l.b16 %v1173
    %v1243 = vunpack.c.l.b16 %v1174
    %v1244 = vunpack.c.l.b16 %v1175
    %v1245 = vunpack.c.l.b16 %v1176
    %v1246 = vunpack.c.l.b16 %v1177
    %v1247 = vunpack.c.l.b16 %v1178
    %v1248 = vunpack.c.l.b16 %v1179
    %v1249 = vunpack.c.l.b16 %v1180
    %v1250 = vunpack.c.l.b16 %v1181
    %v1251 = vunpack.c.l.b16 %v1182
    %v1252 = vunpack.c.l.b16 %v1183
    %v1253 = vunpack.c.l.b16 %v1184
    %v1254 = vunpack.c.l.b16 %v1185
    %v1255 = vunpack.c.l.b16 %v1186
    %v1256 = vunpack.c.l.b16 %v1187
    %v1257 = vunpack.c.l.b16 %v1188
    %v1258 = vunpack.c.l.b16 %v1189
    %v1259 = vunpack.c.l.b16 %v1190
    %v1260 = vunpack.c.l.b16 %v1191
    %v1261 = vunpack.c.l.b16 %v1192
    %v1262 = vunpack.c.l.b16 %v1193
    %v1263 = vunpack.c.l.b16 %v1194
    %v1264 = vunpack.c.l.b16 %v1195
    %v1265 = vunpack.c.l.b16 %v1196
    %v1266 = vunpack.c.l.b16 %v1197
    %v1267 = vunpack.c.l.b16 %v1198
    %v1268 = vunpack.c.l.b16 %v1199
    %v1269 = vunpack.c.l.b16 %v1200
    %v1270 = vunpack.c.l.b16 %v1201
    %v1271 = vunpack.c.l.b16 %v1202
    %v1272 = vunpack.c.l.b16 %v1203
    %v1273 = vunpack.c.l.b16 %v1204
    %v1274 = vpack.c.b16 %v1243, %v1242
    %v1275 = vpack.c.b16 %v1245, %v1244
    %v1276 = vpack.c.b16 %v1247, %v1246
    %v1277 = vpack.c.b16 %v1249, %v1248
    %v1278 = vpack.c.b16 %v1251, %v1250
    %v1279 = vpack.c.b16 %v1253, %v1252
    %v1280 = vpack.c.b16 %v1255, %v1254
    %v1281 = vpack.c.b16 %v1257, %v1256
    %v1282 = vpack.c.b16 %v1259, %v1258
    %v1283 = vpack.c.b16 %v1261, %v1260
    %v1284 = vpack.c.b16 %v1263, %v1262
    %v1285 = vpack.c.b16 %v1265, %v1264
    %v1286 = vpack.c.b16 %v1267, %v1266
    %v1287 = vpack.c.b16 %v1269, %v1268
    %v1288 = vpack.c.b16 %v1271, %v1270
    %v1289 = vpack.c.b16 %v1273, %v1272
    %1306 = vmatprep.subr.bf16.mxu0 0
    %1307 = vmatpush1.bf16.msra.mxu0 %v1281
    %1308 = vmatprep.subr.bf16.mxu0 0
    %1309 = vmatpush1.bf16.msra.mxu0 %v1280
    %1310 = vmatprep.subr.bf16.mxu0 0
    %1311 = vmatpush1.bf16.msra.mxu0 %v1279
    %1312 = vmatprep.subr.bf16.mxu0 0
    %1313 = vmatpush1.bf16.msra.mxu0 %v1278
    %1314 = vmatprep.subr.bf16.mxu0 0
    %1315 = vmatpush1.bf16.msra.mxu0 %v1277
    %1316 = vmatprep.subr.bf16.mxu0 0
    %1317 = vmatpush1.bf16.msra.mxu0 %v1276
    %1318 = vmatprep.subr.bf16.mxu0 0
    %1319 = vmatpush1.bf16.msra.mxu0 %v1275
    %1320 = vmatprep.subr.bf16.mxu0 0
    %1321 = vmatpush1.bf16.msra.mxu0 %v1274
    %1322 = vmatprep.subr.bf16.mxu0 0
    %1323 = vmatpush2.bf16.msra.mxu0 %v1289
    %1324 = vmatprep.subr.bf16.mxu0 0
    %1325 = vmatpush2.bf16.msra.mxu0 %v1288
    %1326 = vmatprep.subr.bf16.mxu0 0
    %1327 = vmatpush2.bf16.msra.mxu0 %v1287
    %1328 = vmatprep.subr.bf16.mxu0 0
    %1329 = vmatpush2.bf16.msra.mxu0 %v1286
    %1330 = vmatprep.subr.bf16.mxu0 0
    %1331 = vmatpush2.bf16.msra.mxu0 %v1285
    %1332 = vmatprep.subr.bf16.mxu0 0
    %1333 = vmatpush2.bf16.msra.mxu0 %v1284
    %1334 = vmatprep.subr.bf16.mxu0 0
    %1335 = vmatpush2.bf16.msra.mxu0 %v1283
    %1336 = vmatprep.subr.bf16.mxu0 0
    %1337 = vmatpush2.bf16.msra.mxu0 %v1282
    %1338 = vmatprep.mubr.bf16.mxu0 %v1117
    %1339 = vmatmul.mubr.bf16.gmra.mxu0 %v1157
    %v1340 = vpop.f32.mrf.mxu0
    %v1341 = vadd.f32 %v1209, %v1340
    %v1342 = vpop.f32.mrf.mxu0
    %v1343 = vpop.f32.mrf.mxu0
    %v1344 = vadd.f32 %v1209, %v1343
    %v1345 = vpop.f32.mrf.mxu0
    %1346 = vmatprep.mubr.bf16.mxu0 %v1118
    %1347 = vmatmul.mubr.bf16.gmra.mxu0 %v1158
    %v1348 = vpop.f32.mrf.mxu0
    %v1349 = vadd.f32 %v1209, %v1348
    %v1350 = vpop.f32.mrf.mxu0
    %v1351 = vpop.f32.mrf.mxu0
    %v1352 = vadd.f32 %v1209, %v1351
    %v1353 = vpop.f32.mrf.mxu0
    %1354 = vmatprep.mubr.bf16.mxu0 %v1119
    %1355 = vmatmul.mubr.bf16.gmra.mxu0 %v1159
    %v1356 = vpop.f32.mrf.mxu0
    %v1357 = vadd.f32 %v1209, %v1356
    %v1358 = vpop.f32.mrf.mxu0
    %v1359 = vpop.f32.mrf.mxu0
    %v1360 = vadd.f32 %v1209, %v1359
    %v1361 = vpop.f32.mrf.mxu0
    %1362 = vmatprep.mubr.bf16.mxu0 %v1120
    %1363 = vmatmul.mubr.bf16.gmra.mxu0 %v1160
    %v1364 = vpop.f32.mrf.mxu0
    %v1365 = vadd.f32 %v1209, %v1364
    %v1366 = vpop.f32.mrf.mxu0
    %v1367 = vpop.f32.mrf.mxu0
    %v1368 = vadd.f32 %v1209, %v1367
    %v1369 = vpop.f32.mrf.mxu0
    %1370 = vmatprep.mubr.bf16.mxu0 %v1121
    %1371 = vmatmul.mubr.bf16.gmra.mxu0 %v1161
    %v1372 = vpop.f32.mrf.mxu0
    %v1373 = vadd.f32 %v1209, %v1372
    %v1374 = vpop.f32.mrf.mxu0
    %v1375 = vpop.f32.mrf.mxu0
    %v1376 = vadd.f32 %v1209, %v1375
    %v1377 = vpop.f32.mrf.mxu0
    %1378 = vmatprep.mubr.bf16.mxu0 %v1122
    %1379 = vmatmul.mubr.bf16.gmra.mxu0 %v1162
    %v1380 = vpop.f32.mrf.mxu0
    %v1381 = vadd.f32 %v1209, %v1380
    %v1382 = vpop.f32.mrf.mxu0
    %v1383 = vpop.f32.mrf.mxu0
    %v1384 = vadd.f32 %v1209, %v1383
    %v1385 = vpop.f32.mrf.mxu0
    %1386 = vmatprep.mubr.bf16.mxu0 %v1123
    %1387 = vmatmul.mubr.bf16.gmra.mxu0 %v1163
    %v1388 = vpop.f32.mrf.mxu0
    %v1389 = vadd.f32 %v1209, %v1388
    %v1390 = vpop.f32.mrf.mxu0
    %v1391 = vpop.f32.mrf.mxu0
    %v1392 = vadd.f32 %v1209, %v1391
    %v1393 = vpop.f32.mrf.mxu0
    %1394 = vmatprep.mubr.bf16.mxu0 %v1124
    %1395 = vmatmul.mubr.bf16.gmra.mxu0 %v1164
    %v1396 = vpop.f32.mrf.mxu0
    %v1397 = vadd.f32 %v1209, %v1396
    %v1398 = vpop.f32.mrf.mxu0
    %v1399 = vpop.f32.mrf.mxu0
    %v1400 = vadd.f32 %v1209, %v1399
    %v1401 = vpop.f32.mrf.mxu0
    %1402 = vdwg.mxu0
    %v1403 = vtanh.pop %v1341
    %v1404 = vtanh.pop %v1344
    %v1405 = vtanh.pop %v1349
    %v1406 = vtanh.pop %v1352
    %v1407 = vtanh.pop %v1357
    %v1408 = vtanh.pop %v1360
    %v1409 = vtanh.pop %v1365
    %v1410 = vtanh.pop %v1368
    %v1411 = vtanh.pop %v1373
    %v1412 = vtanh.pop %v1376
    %v1413 = vtanh.pop %v1381
    %v1414 = vtanh.pop %v1384
    %v1415 = vtanh.pop %v1389
    %v1416 = vtanh.pop %v1392
    %v1417 = vtanh.pop %v1397
    %v1418 = vtanh.pop %v1400
    %s1419 = scalar_lea.vmem [#allocation8], 192
    %v1420 = vld [vmem:[%s1419] sm:$0xf]
    %v1421 = vld [vmem:[%s1419 + $0x4] sm:$0xf]
    %v1422 = vld [vmem:[%s1419 + $0x8] sm:$0xf]
    %v1423 = vld [vmem:[%s1419 + $0xc] sm:$0xf]
    %v1424 = vld [vmem:[%s1419 + $0x10] sm:$0xf]
    %v1425 = vld [vmem:[%s1419 + $0x14] sm:$0xf]
    %v1426 = vld [vmem:[%s1419 + $0x18] sm:$0xf]
    %v1427 = vld [vmem:[%s1419 + $0x1c] sm:$0xf]
    %v1428 = vld [vmem:[%s1419 + $0x20] sm:$0xf]
    %v1429 = vld [vmem:[%s1419 + $0x24] sm:$0xf]
    %v1430 = vld [vmem:[%s1419 + $0x28] sm:$0xf]
    %v1431 = vld [vmem:[%s1419 + $0x2c] sm:$0xf]
    %v1432 = vld [vmem:[%s1419 + $0x30] sm:$0xf]
    %v1433 = vld [vmem:[%s1419 + $0x34] sm:$0xf]
    %v1434 = vld [vmem:[%s1419 + $0x38] sm:$0xf]
    %v1435 = vld [vmem:[%s1419 + $0x3c] sm:$0xf]
    %v1436 = vld [vmem:[#allocation11 + $0x4] sm:$0x1]
    %v1437 = vlaneseq
    %v1438 = vshrl.u32 %v1437, 7
    %v1439 = vsub.s32 0, %v1438
    %v1440 = vrot.slane %v1436, %v1439
    %v1457 = vunpack.c.l.b16 %v1420
    %v1458 = vunpack.c.l.b16 %v1421
    %v1459 = vunpack.c.l.b16 %v1422
    %v1460 = vunpack.c.l.b16 %v1423
    %v1461 = vunpack.c.l.b16 %v1424
    %v1462 = vunpack.c.l.b16 %v1425
    %v1463 = vunpack.c.l.b16 %v1426
    %v1464 = vunpack.c.l.b16 %v1427
    %v1465 = vunpack.c.l.b16 %v1428
    %v1466 = vunpack.c.l.b16 %v1429
    %v1467 = vunpack.c.l.b16 %v1430
    %v1468 = vunpack.c.l.b16 %v1431
    %v1469 = vunpack.c.l.b16 %v1432
    %v1470 = vunpack.c.l.b16 %v1433
    %v1471 = vunpack.c.l.b16 %v1434
    %v1472 = vunpack.c.l.b16 %v1435
    %v1473 = vpack.c.b16 %v1458, %v1457
    %v1474 = vpack.c.b16 %v1460, %v1459
    %v1475 = vpack.c.b16 %v1462, %v1461
    %v1476 = vpack.c.b16 %v1464, %v1463
    %v1477 = vpack.c.b16 %v1466, %v1465
    %v1478 = vpack.c.b16 %v1468, %v1467
    %v1479 = vpack.c.b16 %v1470, %v1469
    %v1480 = vpack.c.b16 %v1472, %v1471
    %1489 = vmatprep.subr.bf16.mxu0 0
    %1490 = vmatpush1.bf16.msra.mxu0 %v1480
    %1491 = vmatprep.subr.bf16.mxu0 0
    %1492 = vmatpush1.bf16.msra.mxu0 %v1479
    %1493 = vmatprep.subr.bf16.mxu0 0
    %1494 = vmatpush1.bf16.msra.mxu0 %v1478
    %1495 = vmatprep.subr.bf16.mxu0 0
    %1496 = vmatpush1.bf16.msra.mxu0 %v1477
    %1497 = vmatprep.subr.bf16.mxu0 0
    %1498 = vmatpush1.bf16.msra.mxu0 %v1476
    %1499 = vmatprep.subr.bf16.mxu0 0
    %1500 = vmatpush1.bf16.msra.mxu0 %v1475
    %1501 = vmatprep.subr.bf16.mxu0 0
    %1502 = vmatpush1.bf16.msra.mxu0 %v1474
    %1503 = vmatprep.subr.bf16.mxu0 0
    %1504 = vmatpush1.bf16.msra.mxu0 %v1473
    %1505 = vmatprep.subr.bf16.mxu0 0
    %1506 = vmatpush2.bf16.msra.mxu0 0
    %1507 = vmatprep.subr.bf16.mxu0 0
    %1508 = vmatpush2.bf16.msra.mxu0 0
    %1509 = vmatprep.subr.bf16.mxu0 0
    %1510 = vmatpush2.bf16.msra.mxu0 0
    %1511 = vmatprep.subr.bf16.mxu0 0
    %1512 = vmatpush2.bf16.msra.mxu0 0
    %1513 = vmatprep.subr.bf16.mxu0 0
    %1514 = vmatpush2.bf16.msra.mxu0 0
    %1515 = vmatprep.subr.bf16.mxu0 0
    %1516 = vmatpush2.bf16.msra.mxu0 0
    %1517 = vmatprep.subr.bf16.mxu0 0
    %1518 = vmatpush2.bf16.msra.mxu0 0
    %1519 = vmatprep.subr.bf16.mxu0 0
    %1520 = vmatpush2.bf16.msra.mxu0 0
    %1521 = vmatprep.mubr.bf16.mxu0 0
    %1522 = vmatmul.mubr.bf16.gmra.mxu0 %v1157
    %v1523 = vpop.f32.mrf.mxu0
    %v1524 = vadd.f32 %v1440, %v1523
    %v1525 = vpop.f32.mrf.mxu0
    %v1526 = vpop.f32.mrf.mxu0
    %v1527 = vadd.f32 %v1440, %v1526
    %v1528 = vpop.f32.mrf.mxu0
    %1529 = vmatprep.mubr.bf16.mxu0 0
    %1530 = vmatmul.mubr.bf16.gmra.mxu0 %v1158
    %v1531 = vpop.f32.mrf.mxu0
    %v1532 = vadd.f32 %v1440, %v1531
    %v1533 = vpop.f32.mrf.mxu0
    %v1534 = vpop.f32.mrf.mxu0
    %v1535 = vadd.f32 %v1440, %v1534
    %v1536 = vpop.f32.mrf.mxu0
    %1537 = vmatprep.mubr.bf16.mxu0 0
    %1538 = vmatmul.mubr.bf16.gmra.mxu0 %v1159
    %v1539 = vpop.f32.mrf.mxu0
    %v1540 = vadd.f32 %v1440, %v1539
    %v1541 = vpop.f32.mrf.mxu0
    %v1542 = vpop.f32.mrf.mxu0
    %v1543 = vadd.f32 %v1440, %v1542
    %v1544 = vpop.f32.mrf.mxu0
    %1545 = vmatprep.mubr.bf16.mxu0 0
    %1546 = vmatmul.mubr.bf16.gmra.mxu0 %v1160
    %v1547 = vpop.f32.mrf.mxu0
    %v1548 = vadd.f32 %v1440, %v1547
    %v1549 = vpop.f32.mrf.mxu0
    %v1550 = vpop.f32.mrf.mxu0
    %v1551 = vadd.f32 %v1440, %v1550
    %v1552 = vpop.f32.mrf.mxu0
    %1553 = vmatprep.mubr.bf16.mxu0 0
    %1554 = vmatmul.mubr.bf16.gmra.mxu0 %v1161
    %v1555 = vpop.f32.mrf.mxu0
    %v1556 = vadd.f32 %v1440, %v1555
    %v1557 = vpop.f32.mrf.mxu0
    %v1558 = vpop.f32.mrf.mxu0
    %v1559 = vadd.f32 %v1440, %v1558
    %v1560 = vpop.f32.mrf.mxu0
    %1561 = vmatprep.mubr.bf16.mxu0 0
    %1562 = vmatmul.mubr.bf16.gmra.mxu0 %v1162
    %v1563 = vpop.f32.mrf.mxu0
    %v1564 = vadd.f32 %v1440, %v1563
    %v1565 = vpop.f32.mrf.mxu0
    %v1566 = vpop.f32.mrf.mxu0
    %v1567 = vadd.f32 %v1440, %v1566
    %v1568 = vpop.f32.mrf.mxu0
    %1569 = vmatprep.mubr.bf16.mxu0 0
    %1570 = vmatmul.mubr.bf16.gmra.mxu0 %v1163
    %v1571 = vpop.f32.mrf.mxu0
    %v1572 = vadd.f32 %v1440, %v1571
    %v1573 = vpop.f32.mrf.mxu0
    %v1574 = vpop.f32.mrf.mxu0
    %v1575 = vadd.f32 %v1440, %v1574
    %v1576 = vpop.f32.mrf.mxu0
    %1577 = vmatprep.mubr.bf16.mxu0 0
    %1578 = vmatmul.mubr.bf16.gmra.mxu0 %v1164
    %v1579 = vpop.f32.mrf.mxu0
    %v1580 = vadd.f32 %v1440, %v1579
    %v1581 = vpop.f32.mrf.mxu0
    %v1582 = vpop.f32.mrf.mxu0
    %v1583 = vadd.f32 %v1440, %v1582
    %v1584 = vpop.f32.mrf.mxu0
    %1585 = vdwg.mxu0
    %v1586 = vtanh.pop %v1524
    %v1587 = vtanh.pop %v1527
    %v1588 = vtanh.pop %v1532
    %v1589 = vtanh.pop %v1535
    %v1590 = vtanh.pop %v1540
    %v1591 = vtanh.pop %v1543
    %v1592 = vtanh.pop %v1548
    %v1593 = vtanh.pop %v1551
    %v1594 = vtanh.pop %v1556
    %v1595 = vtanh.pop %v1559
    %v1596 = vtanh.pop %v1564
    %v1597 = vtanh.pop %v1567
    %v1598 = vtanh.pop %v1572
    %v1599 = vtanh.pop %v1575
    %v1600 = vtanh.pop %v1580
    %v1601 = vtanh.pop %v1583
    %v1602 = vpack.c.bf16 %v1587, %v1586
    %v1603 = vpack.c.bf16 %v1589, %v1588
    %v1604 = vpack.c.bf16 %v1591, %v1590
    %v1605 = vpack.c.bf16 %v1593, %v1592
    %v1606 = vpack.c.bf16 %v1595, %v1594
    %v1607 = vpack.c.bf16 %v1597, %v1596
    %v1608 = vpack.c.bf16 %v1599, %v1598
    %v1609 = vpack.c.bf16 %v1601, %v1600
    %s1610 = scalar_lea.vmem [#allocation8], 256
    %v1611 = vld [vmem:[%s1610] sm:$0xf]
    %v1612 = vld [vmem:[%s1610 + $0x4] sm:$0xf]
    %v1613 = vld [vmem:[%s1610 + $0x8] sm:$0xf]
    %v1614 = vld [vmem:[%s1610 + $0xc] sm:$0xf]
    %v1615 = vld [vmem:[%s1610 + $0x10] sm:$0xf]
    %v1616 = vld [vmem:[%s1610 + $0x14] sm:$0xf]
    %v1617 = vld [vmem:[%s1610 + $0x18] sm:$0xf]
    %v1618 = vld [vmem:[%s1610 + $0x1c] sm:$0xf]
    %v1619 = vld [vmem:[%s1610 + $0x20] sm:$0xf]
    %v1620 = vld [vmem:[%s1610 + $0x24] sm:$0xf]
    %v1621 = vld [vmem:[%s1610 + $0x28] sm:$0xf]
    %v1622 = vld [vmem:[%s1610 + $0x2c] sm:$0xf]
    %v1623 = vld [vmem:[%s1610 + $0x30] sm:$0xf]
    %v1624 = vld [vmem:[%s1610 + $0x34] sm:$0xf]
    %v1625 = vld [vmem:[%s1610 + $0x38] sm:$0xf]
    %v1626 = vld [vmem:[%s1610 + $0x3c] sm:$0xf]
    %v1627 = vld [vmem:[#allocation11 + $0x5] sm:$0x1]
    %v1628 = vlaneseq
    %v1629 = vshrl.u32 %v1628, 7
    %v1630 = vsub.s32 0, %v1629
    %v1631 = vrot.slane %v1627, %v1630
    %v1648 = vunpack.c.l.b16 %v1611
    %v1649 = vunpack.c.l.b16 %v1612
    %v1650 = vunpack.c.l.b16 %v1613
    %v1651 = vunpack.c.l.b16 %v1614
    %v1652 = vunpack.c.l.b16 %v1615
    %v1653 = vunpack.c.l.b16 %v1616
    %v1654 = vunpack.c.l.b16 %v1617
    %v1655 = vunpack.c.l.b16 %v1618
    %v1656 = vunpack.c.l.b16 %v1619
    %v1657 = vunpack.c.l.b16 %v1620
    %v1658 = vunpack.c.l.b16 %v1621
    %v1659 = vunpack.c.l.b16 %v1622
    %v1660 = vunpack.c.l.b16 %v1623
    %v1661 = vunpack.c.l.b16 %v1624
    %v1662 = vunpack.c.l.b16 %v1625
    %v1663 = vunpack.c.l.b16 %v1626
    %v1664 = vpack.c.b16 %v1649, %v1648
    %v1665 = vpack.c.b16 %v1651, %v1650
    %v1666 = vpack.c.b16 %v1653, %v1652
    %v1667 = vpack.c.b16 %v1655, %v1654
    %v1668 = vpack.c.b16 %v1657, %v1656
    %v1669 = vpack.c.b16 %v1659, %v1658
    %v1670 = vpack.c.b16 %v1661, %v1660
    %v1671 = vpack.c.b16 %v1663, %v1662
    %1680 = vmatprep.subr.bf16.mxu0 0
    %1681 = vmatpush1.bf16.msra.mxu0 %v1671
    %1682 = vmatprep.subr.bf16.mxu0 0
    %1683 = vmatpush1.bf16.msra.mxu0 %v1670
    %1684 = vmatprep.subr.bf16.mxu0 0
    %1685 = vmatpush1.bf16.msra.mxu0 %v1669
    %1686 = vmatprep.subr.bf16.mxu0 0
    %1687 = vmatpush1.bf16.msra.mxu0 %v1668
    %1688 = vmatprep.subr.bf16.mxu0 0
    %1689 = vmatpush1.bf16.msra.mxu0 %v1667
    %1690 = vmatprep.subr.bf16.mxu0 0
    %1691 = vmatpush1.bf16.msra.mxu0 %v1666
    %1692 = vmatprep.subr.bf16.mxu0 0
    %1693 = vmatpush1.bf16.msra.mxu0 %v1665
    %1694 = vmatprep.subr.bf16.mxu0 0
    %1695 = vmatpush1.bf16.msra.mxu0 %v1664
    %1696 = vmatprep.subr.bf16.mxu0 0
    %1697 = vmatpush2.bf16.msra.mxu0 0
    %1698 = vmatprep.subr.bf16.mxu0 0
    %1699 = vmatpush2.bf16.msra.mxu0 0
    %1700 = vmatprep.subr.bf16.mxu0 0
    %1701 = vmatpush2.bf16.msra.mxu0 0
    %1702 = vmatprep.subr.bf16.mxu0 0
    %1703 = vmatpush2.bf16.msra.mxu0 0
    %1704 = vmatprep.subr.bf16.mxu0 0
    %1705 = vmatpush2.bf16.msra.mxu0 0
    %1706 = vmatprep.subr.bf16.mxu0 0
    %1707 = vmatpush2.bf16.msra.mxu0 0
    %1708 = vmatprep.subr.bf16.mxu0 0
    %1709 = vmatpush2.bf16.msra.mxu0 0
    %1710 = vmatprep.subr.bf16.mxu0 0
    %1711 = vmatpush2.bf16.msra.mxu0 0
    %1712 = vmatprep.mubr.bf16.mxu0 0
    %1713 = vmatmul.mubr.bf16.gmra.mxu0 %v1602
    %v1714 = vpop.f32.mrf.mxu0
    %v1715 = vadd.f32 %v1631, %v1714
    %v1716 = vpop.f32.mrf.mxu0
    %v1717 = vpop.f32.mrf.mxu0
    %v1718 = vadd.f32 %v1631, %v1717
    %v1719 = vpop.f32.mrf.mxu0
    %1720 = vmatprep.mubr.bf16.mxu0 0
    %1721 = vmatmul.mubr.bf16.gmra.mxu0 %v1603
    %v1722 = vpop.f32.mrf.mxu0
    %v1723 = vadd.f32 %v1631, %v1722
    %v1724 = vpop.f32.mrf.mxu0
    %v1725 = vpop.f32.mrf.mxu0
    %v1726 = vadd.f32 %v1631, %v1725
    %v1727 = vpop.f32.mrf.mxu0
    %1728 = vmatprep.mubr.bf16.mxu0 0
    %1729 = vmatmul.mubr.bf16.gmra.mxu0 %v1604
    %v1730 = vpop.f32.mrf.mxu0
    %v1731 = vadd.f32 %v1631, %v1730
    %v1732 = vpop.f32.mrf.mxu0
    %v1733 = vpop.f32.mrf.mxu0
    %v1734 = vadd.f32 %v1631, %v1733
    %v1735 = vpop.f32.mrf.mxu0
    %1736 = vmatprep.mubr.bf16.mxu0 0
    %1737 = vmatmul.mubr.bf16.gmra.mxu0 %v1605
    %v1738 = vpop.f32.mrf.mxu0
    %v1739 = vadd.f32 %v1631, %v1738
    %v1740 = vpop.f32.mrf.mxu0
    %v1741 = vpop.f32.mrf.mxu0
    %v1742 = vadd.f32 %v1631, %v1741
    %v1743 = vpop.f32.mrf.mxu0
    %1744 = vmatprep.mubr.bf16.mxu0 0
    %1745 = vmatmul.mubr.bf16.gmra.mxu0 %v1606
    %v1746 = vpop.f32.mrf.mxu0
    %v1747 = vadd.f32 %v1631, %v1746
    %v1748 = vpop.f32.mrf.mxu0
    %v1749 = vpop.f32.mrf.mxu0
    %v1750 = vadd.f32 %v1631, %v1749
    %v1751 = vpop.f32.mrf.mxu0
    %1752 = vmatprep.mubr.bf16.mxu0 0
    %1753 = vmatmul.mubr.bf16.gmra.mxu0 %v1607
    %v1754 = vpop.f32.mrf.mxu0
    %v1755 = vadd.f32 %v1631, %v1754
    %v1756 = vpop.f32.mrf.mxu0
    %v1757 = vpop.f32.mrf.mxu0
    %v1758 = vadd.f32 %v1631, %v1757
    %v1759 = vpop.f32.mrf.mxu0
    %1760 = vmatprep.mubr.bf16.mxu0 0
    %1761 = vmatmul.mubr.bf16.gmra.mxu0 %v1608
    %v1762 = vpop.f32.mrf.mxu0
    %v1763 = vadd.f32 %v1631, %v1762
    %v1764 = vpop.f32.mrf.mxu0
    %v1765 = vpop.f32.mrf.mxu0
    %v1766 = vadd.f32 %v1631, %v1765
    %v1767 = vpop.f32.mrf.mxu0
    %1768 = vmatprep.mubr.bf16.mxu0 0
    %1769 = vmatmul.mubr.bf16.gmra.mxu0 %v1609
    %v1770 = vpop.f32.mrf.mxu0
    %v1771 = vadd.f32 %v1631, %v1770
    %v1772 = vpop.f32.mrf.mxu0
    %v1773 = vpop.f32.mrf.mxu0
    %v1774 = vadd.f32 %v1631, %v1773
    %v1775 = vpop.f32.mrf.mxu0
    %1776 = vdwg.mxu0
    %v1777 = vtanh.pop %v1715
    %v1778 = vtanh.pop %v1718
    %v1779 = vtanh.pop %v1723
    %v1780 = vtanh.pop %v1726
    %v1781 = vtanh.pop %v1731
    %v1782 = vtanh.pop %v1734
    %v1783 = vtanh.pop %v1739
    %v1784 = vtanh.pop %v1742
    %v1785 = vtanh.pop %v1747
    %v1786 = vtanh.pop %v1750
    %v1787 = vtanh.pop %v1755
    %v1788 = vtanh.pop %v1758
    %v1789 = vtanh.pop %v1763
    %v1790 = vtanh.pop %v1766
    %v1791 = vtanh.pop %v1771
    %v1792 = vtanh.pop %v1774
    %v1793 = vpack.c.bf16 %v1778, %v1777
    %v1794 = vpack.c.bf16 %v1780, %v1779
    %v1795 = vpack.c.bf16 %v1782, %v1781
    %v1796 = vpack.c.bf16 %v1784, %v1783
    %v1797 = vpack.c.bf16 %v1786, %v1785
    %v1798 = vpack.c.bf16 %v1788, %v1787
    %v1799 = vpack.c.bf16 %v1790, %v1789
    %v1800 = vpack.c.bf16 %v1792, %v1791
    %s1801 = scalar_lea.vmem [#allocation8], 320
    %v1802 = vld [vmem:[%s1801] sm:$0xf]
    %v1803 = vld [vmem:[%s1801 + $0x4] sm:$0xf]
    %v1804 = vld [vmem:[%s1801 + $0x8] sm:$0xf]
    %v1805 = vld [vmem:[%s1801 + $0xc] sm:$0xf]
    %v1806 = vld [vmem:[%s1801 + $0x10] sm:$0xf]
    %v1807 = vld [vmem:[%s1801 + $0x14] sm:$0xf]
    %v1808 = vld [vmem:[%s1801 + $0x18] sm:$0xf]
    %v1809 = vld [vmem:[%s1801 + $0x1c] sm:$0xf]
    %v1810 = vld [vmem:[%s1801 + $0x20] sm:$0xf]
    %v1811 = vld [vmem:[%s1801 + $0x24] sm:$0xf]
    %v1812 = vld [vmem:[%s1801 + $0x28] sm:$0xf]
    %v1813 = vld [vmem:[%s1801 + $0x2c] sm:$0xf]
    %v1814 = vld [vmem:[%s1801 + $0x30] sm:$0xf]
    %v1815 = vld [vmem:[%s1801 + $0x34] sm:$0xf]
    %v1816 = vld [vmem:[%s1801 + $0x38] sm:$0xf]
    %v1817 = vld [vmem:[%s1801 + $0x3c] sm:$0xf]
    %v1818 = vld [vmem:[#allocation11 + $0x6] sm:$0x1]
    %v1819 = vlaneseq
    %v1820 = vshrl.u32 %v1819, 7
    %v1821 = vsub.s32 0, %v1820
    %v1822 = vrot.slane %v1818, %v1821
    %v1839 = vunpack.c.l.b16 %v1802
    %v1840 = vunpack.c.l.b16 %v1803
    %v1841 = vunpack.c.l.b16 %v1804
    %v1842 = vunpack.c.l.b16 %v1805
    %v1843 = vunpack.c.l.b16 %v1806
    %v1844 = vunpack.c.l.b16 %v1807
    %v1845 = vunpack.c.l.b16 %v1808
    %v1846 = vunpack.c.l.b16 %v1809
    %v1847 = vunpack.c.l.b16 %v1810
    %v1848 = vunpack.c.l.b16 %v1811
    %v1849 = vunpack.c.l.b16 %v1812
    %v1850 = vunpack.c.l.b16 %v1813
    %v1851 = vunpack.c.l.b16 %v1814
    %v1852 = vunpack.c.l.b16 %v1815
    %v1853 = vunpack.c.l.b16 %v1816
    %v1854 = vunpack.c.l.b16 %v1817
    %v1855 = vpack.c.b16 %v1840, %v1839
    %v1856 = vpack.c.b16 %v1842, %v1841
    %v1857 = vpack.c.b16 %v1844, %v1843
    %v1858 = vpack.c.b16 %v1846, %v1845
    %v1859 = vpack.c.b16 %v1848, %v1847
    %v1860 = vpack.c.b16 %v1850, %v1849
    %v1861 = vpack.c.b16 %v1852, %v1851
    %v1862 = vpack.c.b16 %v1854, %v1853
    %1871 = vmatprep.subr.bf16.mxu0 0
    %1872 = vmatpush1.bf16.msra.mxu0 %v1862
    %1873 = vmatprep.subr.bf16.mxu0 0
    %1874 = vmatpush1.bf16.msra.mxu0 %v1861
    %1875 = vmatprep.subr.bf16.mxu0 0
    %1876 = vmatpush1.bf16.msra.mxu0 %v1860
    %1877 = vmatprep.subr.bf16.mxu0 0
    %1878 = vmatpush1.bf16.msra.mxu0 %v1859
    %1879 = vmatprep.subr.bf16.mxu0 0
    %1880 = vmatpush1.bf16.msra.mxu0 %v1858
    %1881 = vmatprep.subr.bf16.mxu0 0
    %1882 = vmatpush1.bf16.msra.mxu0 %v1857
    %1883 = vmatprep.subr.bf16.mxu0 0
    %1884 = vmatpush1.bf16.msra.mxu0 %v1856
    %1885 = vmatprep.subr.bf16.mxu0 0
    %1886 = vmatpush1.bf16.msra.mxu0 %v1855
    %1887 = vmatprep.subr.bf16.mxu0 0
    %1888 = vmatpush2.bf16.msra.mxu0 0
    %1889 = vmatprep.subr.bf16.mxu0 0
    %1890 = vmatpush2.bf16.msra.mxu0 0
    %1891 = vmatprep.subr.bf16.mxu0 0
    %1892 = vmatpush2.bf16.msra.mxu0 0
    %1893 = vmatprep.subr.bf16.mxu0 0
    %1894 = vmatpush2.bf16.msra.mxu0 0
    %1895 = vmatprep.subr.bf16.mxu0 0
    %1896 = vmatpush2.bf16.msra.mxu0 0
    %1897 = vmatprep.subr.bf16.mxu0 0
    %1898 = vmatpush2.bf16.msra.mxu0 0
    %1899 = vmatprep.subr.bf16.mxu0 0
    %1900 = vmatpush2.bf16.msra.mxu0 0
    %1901 = vmatprep.subr.bf16.mxu0 0
    %1902 = vmatpush2.bf16.msra.mxu0 0
    %1903 = vmatprep.mubr.bf16.mxu0 0
    %1904 = vmatmul.mubr.bf16.gmra.mxu0 %v1793
    %v1905 = vpop.f32.mrf.mxu0
    %v1906 = vadd.f32 %v1822, %v1905
    %v1907 = vpop.f32.mrf.mxu0
    %v1908 = vpop.f32.mrf.mxu0
    %v1909 = vadd.f32 %v1822, %v1908
    %v1910 = vpop.f32.mrf.mxu0
    %1911 = vmatprep.mubr.bf16.mxu0 0
    %1912 = vmatmul.mubr.bf16.gmra.mxu0 %v1794
    %v1913 = vpop.f32.mrf.mxu0
    %v1914 = vadd.f32 %v1822, %v1913
    %v1915 = vpop.f32.mrf.mxu0
    %v1916 = vpop.f32.mrf.mxu0
    %v1917 = vadd.f32 %v1822, %v1916
    %v1918 = vpop.f32.mrf.mxu0
    %1919 = vmatprep.mubr.bf16.mxu0 0
    %1920 = vmatmul.mubr.bf16.gmra.mxu0 %v1795
    %v1921 = vpop.f32.mrf.mxu0
    %v1922 = vadd.f32 %v1822, %v1921
    %v1923 = vpop.f32.mrf.mxu0
    %v1924 = vpop.f32.mrf.mxu0
    %v1925 = vadd.f32 %v1822, %v1924
    %v1926 = vpop.f32.mrf.mxu0
    %1927 = vmatprep.mubr.bf16.mxu0 0
    %1928 = vmatmul.mubr.bf16.gmra.mxu0 %v1796
    %v1929 = vpop.f32.mrf.mxu0
    %v1930 = vadd.f32 %v1822, %v1929
    %v1931 = vpop.f32.mrf.mxu0
    %v1932 = vpop.f32.mrf.mxu0
    %v1933 = vadd.f32 %v1822, %v1932
    %v1934 = vpop.f32.mrf.mxu0
    %1935 = vmatprep.mubr.bf16.mxu0 0
    %1936 = vmatmul.mubr.bf16.gmra.mxu0 %v1797
    %v1937 = vpop.f32.mrf.mxu0
    %v1938 = vadd.f32 %v1822, %v1937
    %v1939 = vpop.f32.mrf.mxu0
    %v1940 = vpop.f32.mrf.mxu0
    %v1941 = vadd.f32 %v1822, %v1940
    %v1942 = vpop.f32.mrf.mxu0
    %1943 = vmatprep.mubr.bf16.mxu0 0
    %1944 = vmatmul.mubr.bf16.gmra.mxu0 %v1798
    %v1945 = vpop.f32.mrf.mxu0
    %v1946 = vadd.f32 %v1822, %v1945
    %v1947 = vpop.f32.mrf.mxu0
    %v1948 = vpop.f32.mrf.mxu0
    %v1949 = vadd.f32 %v1822, %v1948
    %v1950 = vpop.f32.mrf.mxu0
    %1951 = vmatprep.mubr.bf16.mxu0 0
    %1952 = vmatmul.mubr.bf16.gmra.mxu0 %v1799
    %v1953 = vpop.f32.mrf.mxu0
    %v1954 = vadd.f32 %v1822, %v1953
    %v1955 = vpop.f32.mrf.mxu0
    %v1956 = vpop.f32.mrf.mxu0
    %v1957 = vadd.f32 %v1822, %v1956
    %v1958 = vpop.f32.mrf.mxu0
    %1959 = vmatprep.mubr.bf16.mxu0 0
    %1960 = vmatmul.mubr.bf16.gmra.mxu0 %v1800
    %v1961 = vpop.f32.mrf.mxu0
    %v1962 = vadd.f32 %v1822, %v1961
    %v1963 = vpop.f32.mrf.mxu0
    %v1964 = vpop.f32.mrf.mxu0
    %v1965 = vadd.f32 %v1822, %v1964
    %v1966 = vpop.f32.mrf.mxu0
    %1967 = vdwg.mxu0
    %v1968 = vadd.f32 %v1906, %v1403
    %v1969 = vadd.f32 %v1909, %v1404
    %v1970 = vadd.f32 %v1914, %v1405
    %v1971 = vadd.f32 %v1917, %v1406
    %v1972 = vadd.f32 %v1922, %v1407
    %v1973 = vadd.f32 %v1925, %v1408
    %v1974 = vadd.f32 %v1930, %v1409
    %v1975 = vadd.f32 %v1933, %v1410
    %v1976 = vadd.f32 %v1938, %v1411
    %v1977 = vadd.f32 %v1941, %v1412
    %v1978 = vadd.f32 %v1946, %v1413
    %v1979 = vadd.f32 %v1949, %v1414
    %v1980 = vadd.f32 %v1954, %v1415
    %v1981 = vadd.f32 %v1957, %v1416
    %v1982 = vadd.f32 %v1962, %v1417
    %v1983 = vadd.f32 %v1965, %v1418
    %v1984 = vmul.f32 %v1968, %v830
    %v1985 = vmul.f32 %v1969, %v833
    %v1986 = vmul.f32 %v1970, %v838
    %v1987 = vmul.f32 %v1971, %v841
    %v1988 = vmul.f32 %v1972, %v846
    %v1989 = vmul.f32 %v1973, %v849
    %v1990 = vmul.f32 %v1974, %v854
    %v1991 = vmul.f32 %v1975, %v857
    %v1992 = vmul.f32 %v1976, %v862
    %v1993 = vmul.f32 %v1977, %v865
    %v1994 = vmul.f32 %v1978, %v870
    %v1995 = vmul.f32 %v1979, %v873
    %v1996 = vmul.f32 %v1980, %v878
    %v1997 = vmul.f32 %v1981, %v881
    %v1998 = vmul.f32 %v1982, %v886
    %v1999 = vmul.f32 %v1983, %v889
    %2000 = vadd.xlane.f32.xlu0 %v1984
    %v2001 = vpop.xlane.xlu0 %2000
    %2002 = vadd.xlane.f32.xlu0 %v1985
    %v2003 = vpop.xlane.xlu0 %2002
    %2004 = vadd.xlane.f32.xlu0 %v1986
    %v2005 = vpop.xlane.xlu0 %2004
    %2006 = vadd.xlane.f32.xlu0 %v1987
    %v2007 = vpop.xlane.xlu0 %2006
    %2008 = vadd.xlane.f32.xlu0 %v1988
    %v2009 = vpop.xlane.xlu0 %2008
    %2010 = vadd.xlane.f32.xlu0 %v1989
    %v2011 = vpop.xlane.xlu0 %2010
    %2012 = vadd.xlane.f32.xlu0 %v1990
    %v2013 = vpop.xlane.xlu0 %2012
    %2014 = vadd.xlane.f32.xlu0 %v1991
    %v2015 = vpop.xlane.xlu0 %2014
    %2016 = vadd.xlane.f32.xlu0 %v1992
    %v2017 = vpop.xlane.xlu0 %2016
    %2018 = vadd.xlane.f32.xlu0 %v1993
    %v2019 = vpop.xlane.xlu0 %2018
    %2020 = vadd.xlane.f32.xlu0 %v1994
    %v2021 = vpop.xlane.xlu0 %2020
    %2022 = vadd.xlane.f32.xlu0 %v1995
    %v2023 = vpop.xlane.xlu0 %2022
    %2024 = vadd.xlane.f32.xlu0 %v1996
    %v2025 = vpop.xlane.xlu0 %2024
    %2026 = vadd.xlane.f32.xlu0 %v1997
    %v2027 = vpop.xlane.xlu0 %2026
    %2028 = vadd.xlane.f32.xlu0 %v1998
    %v2029 = vpop.xlane.xlu0 %2028
    %2030 = vadd.xlane.f32.xlu0 %v1999
    %v2031 = vpop.xlane.xlu0 %2030
    %v2032 = vrcp.pop 128.0
    %v2033 = vmul.f32 %v2001, %v2032
    %v2034 = vmul.f32 %v2003, %v2032
    %v2035 = vmul.f32 %v2005, %v2032
    %v2036 = vmul.f32 %v2007, %v2032
    %v2037 = vmul.f32 %v2009, %v2032
    %v2038 = vmul.f32 %v2011, %v2032
    %v2039 = vmul.f32 %v2013, %v2032
    %v2040 = vmul.f32 %v2015, %v2032
    %v2041 = vmul.f32 %v2017, %v2032
    %v2042 = vmul.f32 %v2019, %v2032
    %v2043 = vmul.f32 %v2021, %v2032
    %v2044 = vmul.f32 %v2023, %v2032
    %v2045 = vmul.f32 %v2025, %v2032
    %v2046 = vmul.f32 %v2027, %v2032
    %v2047 = vmul.f32 %v2029, %v2032
    %v2048 = vmul.f32 %v2031, %v2032
    %v2049 = vsub.f32 %v1984, %v2033
    %v2050 = vsub.f32 %v1985, %v2034
    %v2051 = vsub.f32 %v1986, %v2035
    %v2052 = vsub.f32 %v1987, %v2036
    %v2053 = vsub.f32 %v1988, %v2037
    %v2054 = vsub.f32 %v1989, %v2038
    %v2055 = vsub.f32 %v1990, %v2039
    %v2056 = vsub.f32 %v1991, %v2040
    %v2057 = vsub.f32 %v1992, %v2041
    %v2058 = vsub.f32 %v1993, %v2042
    %v2059 = vsub.f32 %v1994, %v2043
    %v2060 = vsub.f32 %v1995, %v2044
    %v2061 = vsub.f32 %v1996, %v2045
    %v2062 = vsub.f32 %v1997, %v2046
    %v2063 = vsub.f32 %v1998, %v2047
    %v2064 = vsub.f32 %v1999, %v2048
    %v2065 = vmul.f32 %v2049, %v2049
    %v2066 = vmul.f32 %v2050, %v2050
    %v2067 = vmul.f32 %v2051, %v2051
    %v2068 = vmul.f32 %v2052, %v2052
    %v2069 = vmul.f32 %v2053, %v2053
    %v2070 = vmul.f32 %v2054, %v2054
    %v2071 = vmul.f32 %v2055, %v2055
    %v2072 = vmul.f32 %v2056, %v2056
    %v2073 = vmul.f32 %v2057, %v2057
    %v2074 = vmul.f32 %v2058, %v2058
    %v2075 = vmul.f32 %v2059, %v2059
    %v2076 = vmul.f32 %v2060, %v2060
    %v2077 = vmul.f32 %v2061, %v2061
    %v2078 = vmul.f32 %v2062, %v2062
    %v2079 = vmul.f32 %v2063, %v2063
    %v2080 = vmul.f32 %v2064, %v2064
    %2081 = vadd.xlane.f32.xlu0 %v2065
    %v2082 = vpop.xlane.xlu0 %2081
    %2083 = vadd.xlane.f32.xlu0 %v2066
    %v2084 = vpop.xlane.xlu0 %2083
    %2085 = vadd.xlane.f32.xlu0 %v2067
    %v2086 = vpop.xlane.xlu0 %2085
    %2087 = vadd.xlane.f32.xlu0 %v2068
    %v2088 = vpop.xlane.xlu0 %2087
    %2089 = vadd.xlane.f32.xlu0 %v2069
    %v2090 = vpop.xlane.xlu0 %2089
    %2091 = vadd.xlane.f32.xlu0 %v2070
    %v2092 = vpop.xlane.xlu0 %2091
    %2093 = vadd.xlane.f32.xlu0 %v2071
    %v2094 = vpop.xlane.xlu0 %2093
    %2095 = vadd.xlane.f32.xlu0 %v2072
    %v2096 = vpop.xlane.xlu0 %2095
    %2097 = vadd.xlane.f32.xlu0 %v2073
    %v2098 = vpop.xlane.xlu0 %2097
    %2099 = vadd.xlane.f32.xlu0 %v2074
    %v2100 = vpop.xlane.xlu0 %2099
    %2101 = vadd.xlane.f32.xlu0 %v2075
    %v2102 = vpop.xlane.xlu0 %2101
    %2103 = vadd.xlane.f32.xlu0 %v2076
    %v2104 = vpop.xlane.xlu0 %2103
    %2105 = vadd.xlane.f32.xlu0 %v2077
    %v2106 = vpop.xlane.xlu0 %2105
    %2107 = vadd.xlane.f32.xlu0 %v2078
    %v2108 = vpop.xlane.xlu0 %2107
    %2109 = vadd.xlane.f32.xlu0 %v2079
    %v2110 = vpop.xlane.xlu0 %2109
    %2111 = vadd.xlane.f32.xlu0 %v2080
    %v2112 = vpop.xlane.xlu0 %2111
    %v2113 = vmul.f32 %v2082, %v2032
    %v2114 = vmul.f32 %v2084, %v2032
    %v2115 = vmul.f32 %v2086, %v2032
    %v2116 = vmul.f32 %v2088, %v2032
    %v2117 = vmul.f32 %v2090, %v2032
    %v2118 = vmul.f32 %v2092, %v2032
    %v2119 = vmul.f32 %v2094, %v2032
    %v2120 = vmul.f32 %v2096, %v2032
    %v2121 = vmul.f32 %v2098, %v2032
    %v2122 = vmul.f32 %v2100, %v2032
    %v2123 = vmul.f32 %v2102, %v2032
    %v2124 = vmul.f32 %v2104, %v2032
    %v2125 = vmul.f32 %v2106, %v2032
    %v2126 = vmul.f32 %v2108, %v2032
    %v2127 = vmul.f32 %v2110, %v2032
    %v2128 = vmul.f32 %v2112, %v2032
    %v2129 = vadd.f32 %v2113, 1e-05
    %v2130 = vadd.f32 %v2114, 1e-05
    %v2131 = vadd.f32 %v2115, 1e-05
    %v2132 = vadd.f32 %v2116, 1e-05
    %v2133 = vadd.f32 %v2117, 1e-05
    %v2134 = vadd.f32 %v2118, 1e-05
    %v2135 = vadd.f32 %v2119, 1e-05
    %v2136 = vadd.f32 %v2120, 1e-05
    %v2137 = vadd.f32 %v2121, 1e-05
    %v2138 = vadd.f32 %v2122, 1e-05
    %v2139 = vadd.f32 %v2123, 1e-05
    %v2140 = vadd.f32 %v2124, 1e-05
    %v2141 = vadd.f32 %v2125, 1e-05
    %v2142 = vadd.f32 %v2126, 1e-05
    %v2143 = vadd.f32 %v2127, 1e-05
    %v2144 = vadd.f32 %v2128, 1e-05
    %v2145 = vrsqrt.pop %v2129
    %v2146 = vrsqrt.pop %v2130
    %v2147 = vrsqrt.pop %v2131
    %v2148 = vrsqrt.pop %v2132
    %v2149 = vrsqrt.pop %v2133
    %v2150 = vrsqrt.pop %v2134
    %v2151 = vrsqrt.pop %v2135
    %v2152 = vrsqrt.pop %v2136
    %v2153 = vrsqrt.pop %v2137
    %v2154 = vrsqrt.pop %v2138
    %v2155 = vrsqrt.pop %v2139
    %v2156 = vrsqrt.pop %v2140
    %v2157 = vrsqrt.pop %v2141
    %v2158 = vrsqrt.pop %v2142
    %v2159 = vrsqrt.pop %v2143
    %v2160 = vrsqrt.pop %v2144
    %v2161 = vmul.f32 %v2049, %v2145
    %v2162 = vmul.f32 %v2050, %v2146
    %v2163 = vmul.f32 %v2051, %v2147
    %v2164 = vmul.f32 %v2052, %v2148
    %v2165 = vmul.f32 %v2053, %v2149
    %v2166 = vmul.f32 %v2054, %v2150
    %v2167 = vmul.f32 %v2055, %v2151
    %v2168 = vmul.f32 %v2056, %v2152
    %v2169 = vmul.f32 %v2057, %v2153
    %v2170 = vmul.f32 %v2058, %v2154
    %v2171 = vmul.f32 %v2059, %v2155
    %v2172 = vmul.f32 %v2060, %v2156
    %v2173 = vmul.f32 %v2061, %v2157
    %v2174 = vmul.f32 %v2062, %v2158
    %v2175 = vmul.f32 %v2063, %v2159
    %v2176 = vmul.f32 %v2064, %v2160
    %v2177 = vld [vmem:[#allocation11 + $0x7] sm:$0x1]
    %v2178 = vlaneseq
    %v2179 = vshrl.u32 %v2178, 7
    %v2180 = vsub.s32 0, %v2179
    %v2181 = vrot.slane %v2177, %v2180
    %v2182 = vmul.f32 %v2161, %v2181
    %v2183 = vmul.f32 %v2162, %v2181
    %v2184 = vmul.f32 %v2163, %v2181
    %v2185 = vmul.f32 %v2164, %v2181
    %v2186 = vmul.f32 %v2165, %v2181
    %v2187 = vmul.f32 %v2166, %v2181
    %v2188 = vmul.f32 %v2167, %v2181
    %v2189 = vmul.f32 %v2168, %v2181
    %v2190 = vmul.f32 %v2169, %v2181
    %v2191 = vmul.f32 %v2170, %v2181
    %v2192 = vmul.f32 %v2171, %v2181
    %v2193 = vmul.f32 %v2172, %v2181
    %v2194 = vmul.f32 %v2173, %v2181
    %v2195 = vmul.f32 %v2174, %v2181
    %v2196 = vmul.f32 %v2175, %v2181
    %v2197 = vmul.f32 %v2176, %v2181
    %v2198 = vld [vmem:[#allocation11 + $0x8] sm:$0x1]
    %v2199 = vlaneseq
    %v2200 = vshrl.u32 %v2199, 7
    %v2201 = vsub.s32 0, %v2200
    %v2202 = vrot.slane %v2198, %v2201
    %v2203 = vadd.f32 %v2182, %v2202
    %v2204 = vadd.f32 %v2183, %v2202
    %v2205 = vadd.f32 %v2184, %v2202
    %v2206 = vadd.f32 %v2185, %v2202
    %v2207 = vadd.f32 %v2186, %v2202
    %v2208 = vadd.f32 %v2187, %v2202
    %v2209 = vadd.f32 %v2188, %v2202
    %v2210 = vadd.f32 %v2189, %v2202
    %v2211 = vadd.f32 %v2190, %v2202
    %v2212 = vadd.f32 %v2191, %v2202
    %v2213 = vadd.f32 %v2192, %v2202
    %v2214 = vadd.f32 %v2193, %v2202
    %v2215 = vadd.f32 %v2194, %v2202
    %v2216 = vadd.f32 %v2195, %v2202
    %v2217 = vadd.f32 %v2196, %v2202
    %v2218 = vadd.f32 %v2197, %v2202
    %v2219 = vtanh.pop %v2203
    %v2220 = vtanh.pop %v2204
    %v2221 = vtanh.pop %v2205
    %v2222 = vtanh.pop %v2206
    %v2223 = vtanh.pop %v2207
    %v2224 = vtanh.pop %v2208
    %v2225 = vtanh.pop %v2209
    %v2226 = vtanh.pop %v2210
    %v2227 = vtanh.pop %v2211
    %v2228 = vtanh.pop %v2212
    %v2229 = vtanh.pop %v2213
    %v2230 = vtanh.pop %v2214
    %v2231 = vtanh.pop %v2215
    %v2232 = vtanh.pop %v2216
    %v2233 = vtanh.pop %v2217
    %v2234 = vtanh.pop %v2218
    %v2235 = vpack.c.bf16 %v2220, %v2219
    %v2236 = vpack.c.bf16 %v2222, %v2221
    %v2237 = vpack.c.bf16 %v2224, %v2223
    %v2238 = vpack.c.bf16 %v2226, %v2225
    %v2239 = vpack.c.bf16 %v2228, %v2227
    %v2240 = vpack.c.bf16 %v2230, %v2229
    %v2241 = vpack.c.bf16 %v2232, %v2231
    %v2242 = vpack.c.bf16 %v2234, %v2233
    %s2243 = scalar_lea.vmem [#allocation8], 384
    %v2244 = vld [vmem:[%s2243] sm:$0xf]
    %v2245 = vld [vmem:[%s2243 + $0x4] sm:$0xf]
    %v2246 = vld [vmem:[%s2243 + $0x8] sm:$0xf]
    %v2247 = vld [vmem:[%s2243 + $0xc] sm:$0xf]
    %v2248 = vld [vmem:[%s2243 + $0x10] sm:$0xf]
    %v2249 = vld [vmem:[%s2243 + $0x14] sm:$0xf]
    %v2250 = vld [vmem:[%s2243 + $0x18] sm:$0xf]
    %v2251 = vld [vmem:[%s2243 + $0x1c] sm:$0xf]
    %v2252 = vld [vmem:[%s2243 + $0x20] sm:$0xf]
    %v2253 = vld [vmem:[%s2243 + $0x24] sm:$0xf]
    %v2254 = vld [vmem:[%s2243 + $0x28] sm:$0xf]
    %v2255 = vld [vmem:[%s2243 + $0x2c] sm:$0xf]
    %v2256 = vld [vmem:[%s2243 + $0x30] sm:$0xf]
    %v2257 = vld [vmem:[%s2243 + $0x34] sm:$0xf]
    %v2258 = vld [vmem:[%s2243 + $0x38] sm:$0xf]
    %v2259 = vld [vmem:[%s2243 + $0x3c] sm:$0xf]
    %v2260 = vld [vmem:[#allocation11 + $0x9] sm:$0x1]
    %v2261 = vlaneseq
    %v2262 = vshrl.u32 %v2261, 7
    %v2263 = vsub.s32 0, %v2262
    %v2264 = vrot.slane %v2260, %v2263
    %v2281 = vunpack.c.l.b16 %v2244
    %v2282 = vunpack.c.l.b16 %v2245
    %v2283 = vunpack.c.l.b16 %v2246
    %v2284 = vunpack.c.l.b16 %v2247
    %v2285 = vunpack.c.l.b16 %v2248
    %v2286 = vunpack.c.l.b16 %v2249
    %v2287 = vunpack.c.l.b16 %v2250
    %v2288 = vunpack.c.l.b16 %v2251
    %v2289 = vunpack.c.l.b16 %v2252
    %v2290 = vunpack.c.l.b16 %v2253
    %v2291 = vunpack.c.l.b16 %v2254
    %v2292 = vunpack.c.l.b16 %v2255
    %v2293 = vunpack.c.l.b16 %v2256
    %v2294 = vunpack.c.l.b16 %v2257
    %v2295 = vunpack.c.l.b16 %v2258
    %v2296 = vunpack.c.l.b16 %v2259
    %v2297 = vpack.c.b16 %v2282, %v2281
    %v2298 = vpack.c.b16 %v2284, %v2283
    %v2299 = vpack.c.b16 %v2286, %v2285
    %v2300 = vpack.c.b16 %v2288, %v2287
    %v2301 = vpack.c.b16 %v2290, %v2289
    %v2302 = vpack.c.b16 %v2292, %v2291
    %v2303 = vpack.c.b16 %v2294, %v2293
    %v2304 = vpack.c.b16 %v2296, %v2295
    %2313 = vmatprep.subr.bf16.mxu0 0
    %2314 = vmatpush1.bf16.msra.mxu0 %v2304
    %2315 = vmatprep.subr.bf16.mxu0 0
    %2316 = vmatpush1.bf16.msra.mxu0 %v2303
    %2317 = vmatprep.subr.bf16.mxu0 0
    %2318 = vmatpush1.bf16.msra.mxu0 %v2302
    %2319 = vmatprep.subr.bf16.mxu0 0
    %2320 = vmatpush1.bf16.msra.mxu0 %v2301
    %2321 = vmatprep.subr.bf16.mxu0 0
    %2322 = vmatpush1.bf16.msra.mxu0 %v2300
    %2323 = vmatprep.subr.bf16.mxu0 0
    %2324 = vmatpush1.bf16.msra.mxu0 %v2299
    %2325 = vmatprep.subr.bf16.mxu0 0
    %2326 = vmatpush1.bf16.msra.mxu0 %v2298
    %2327 = vmatprep.subr.bf16.mxu0 0
    %2328 = vmatpush1.bf16.msra.mxu0 %v2297
    %2329 = vmatprep.subr.bf16.mxu0 0
    %2330 = vmatpush2.bf16.msra.mxu0 0
    %2331 = vmatprep.subr.bf16.mxu0 0
    %2332 = vmatpush2.bf16.msra.mxu0 0
    %2333 = vmatprep.subr.bf16.mxu0 0
    %2334 = vmatpush2.bf16.msra.mxu0 0
    %2335 = vmatprep.subr.bf16.mxu0 0
    %2336 = vmatpush2.bf16.msra.mxu0 0
    %2337 = vmatprep.subr.bf16.mxu0 0
    %2338 = vmatpush2.bf16.msra.mxu0 0
    %2339 = vmatprep.subr.bf16.mxu0 0
    %2340 = vmatpush2.bf16.msra.mxu0 0
    %2341 = vmatprep.subr.bf16.mxu0 0
    %2342 = vmatpush2.bf16.msra.mxu0 0
    %2343 = vmatprep.subr.bf16.mxu0 0
    %2344 = vmatpush2.bf16.msra.mxu0 0
    %2345 = vmatprep.mubr.bf16.mxu0 0
    %2346 = vmatmul.mubr.bf16.gmra.mxu0 %v2235
    %v2347 = vpop.f32.mrf.mxu0
    %v2348 = vadd.f32 %v2264, %v2347
    %v2349 = vpop.f32.mrf.mxu0
    %v2350 = vpop.f32.mrf.mxu0
    %v2351 = vadd.f32 %v2264, %v2350
    %v2352 = vpop.f32.mrf.mxu0
    %2353 = vmatprep.mubr.bf16.mxu0 0
    %2354 = vmatmul.mubr.bf16.gmra.mxu0 %v2236
    %v2355 = vpop.f32.mrf.mxu0
    %v2356 = vadd.f32 %v2264, %v2355
    %v2357 = vpop.f32.mrf.mxu0
    %v2358 = vpop.f32.mrf.mxu0
    %v2359 = vadd.f32 %v2264, %v2358
    %v2360 = vpop.f32.mrf.mxu0
    %2361 = vmatprep.mubr.bf16.mxu0 0
    %2362 = vmatmul.mubr.bf16.gmra.mxu0 %v2237
    %v2363 = vpop.f32.mrf.mxu0
    %v2364 = vadd.f32 %v2264, %v2363
    %v2365 = vpop.f32.mrf.mxu0
    %v2366 = vpop.f32.mrf.mxu0
    %v2367 = vadd.f32 %v2264, %v2366
    %v2368 = vpop.f32.mrf.mxu0
    %2369 = vmatprep.mubr.bf16.mxu0 0
    %2370 = vmatmul.mubr.bf16.gmra.mxu0 %v2238
    %v2371 = vpop.f32.mrf.mxu0
    %v2372 = vadd.f32 %v2264, %v2371
    %v2373 = vpop.f32.mrf.mxu0
    %v2374 = vpop.f32.mrf.mxu0
    %v2375 = vadd.f32 %v2264, %v2374
    %v2376 = vpop.f32.mrf.mxu0
    %2377 = vmatprep.mubr.bf16.mxu0 0
    %2378 = vmatmul.mubr.bf16.gmra.mxu0 %v2239
    %v2379 = vpop.f32.mrf.mxu0
    %v2380 = vadd.f32 %v2264, %v2379
    %v2381 = vpop.f32.mrf.mxu0
    %v2382 = vpop.f32.mrf.mxu0
    %v2383 = vadd.f32 %v2264, %v2382
    %v2384 = vpop.f32.mrf.mxu0
    %2385 = vmatprep.mubr.bf16.mxu0 0
    %2386 = vmatmul.mubr.bf16.gmra.mxu0 %v2240
    %v2387 = vpop.f32.mrf.mxu0
    %v2388 = vadd.f32 %v2264, %v2387
    %v2389 = vpop.f32.mrf.mxu0
    %v2390 = vpop.f32.mrf.mxu0
    %v2391 = vadd.f32 %v2264, %v2390
    %v2392 = vpop.f32.mrf.mxu0
    %2393 = vmatprep.mubr.bf16.mxu0 0
    %2394 = vmatmul.mubr.bf16.gmra.mxu0 %v2241
    %v2395 = vpop.f32.mrf.mxu0
    %v2396 = vadd.f32 %v2264, %v2395
    %v2397 = vpop.f32.mrf.mxu0
    %v2398 = vpop.f32.mrf.mxu0
    %v2399 = vadd.f32 %v2264, %v2398
    %v2400 = vpop.f32.mrf.mxu0
    %2401 = vmatprep.mubr.bf16.mxu0 0
    %2402 = vmatmul.mubr.bf16.gmra.mxu0 %v2242
    %v2403 = vpop.f32.mrf.mxu0
    %v2404 = vadd.f32 %v2264, %v2403
    %v2405 = vpop.f32.mrf.mxu0
    %v2406 = vpop.f32.mrf.mxu0
    %v2407 = vadd.f32 %v2264, %v2406
    %v2408 = vpop.f32.mrf.mxu0
    %2409 = vdwg.mxu0
    %v2410 = vpack.c.bf16 %v2351, %v2348
    %v2411 = vpack.c.bf16 %v2359, %v2356
    %v2412 = vpack.c.bf16 %v2367, %v2364
    %v2413 = vpack.c.bf16 %v2375, %v2372
    %v2414 = vpack.c.bf16 %v2383, %v2380
    %v2415 = vpack.c.bf16 %v2391, %v2388
    %v2416 = vpack.c.bf16 %v2399, %v2396
    %v2417 = vpack.c.bf16 %v2407, %v2404
    %s2418 = scalar_lea.vmem [#allocation10], 128
    %v2419 = vld [vmem:[%s2418] sm:$0xf]
    %v2420 = vld [vmem:[%s2418 + $0x4] sm:$0xf]
    %v2421 = vld [vmem:[%s2418 + $0x8] sm:$0xf]
    %v2422 = vld [vmem:[%s2418 + $0xc] sm:$0xf]
    %v2423 = vld [vmem:[%s2418 + $0x10] sm:$0xf]
    %v2424 = vld [vmem:[%s2418 + $0x14] sm:$0xf]
    %v2425 = vld [vmem:[%s2418 + $0x18] sm:$0xf]
    %v2426 = vld [vmem:[%s2418 + $0x1c] sm:$0xf]
    %v2427 = vld [vmem:[%s2418 + $0x20] sm:$0xf]
    %v2428 = vld [vmem:[%s2418 + $0x24] sm:$0xf]
    %v2429 = vld [vmem:[%s2418 + $0x28] sm:$0xf]
    %v2430 = vld [vmem:[%s2418 + $0x2c] sm:$0xf]
    %v2431 = vld [vmem:[%s2418 + $0x30] sm:$0xf]
    %v2432 = vld [vmem:[%s2418 + $0x34] sm:$0xf]
    %v2433 = vld [vmem:[%s2418 + $0x38] sm:$0xf]
    %v2434 = vld [vmem:[%s2418 + $0x3c] sm:$0xf]
    %v2435 = vld [vmem:[%s2418 + $0x40] sm:$0xf]
    %v2436 = vld [vmem:[%s2418 + $0x44] sm:$0xf]
    %v2437 = vld [vmem:[%s2418 + $0x48] sm:$0xf]
    %v2438 = vld [vmem:[%s2418 + $0x4c] sm:$0xf]
    %v2439 = vld [vmem:[%s2418 + $0x50] sm:$0xf]
    %v2440 = vld [vmem:[%s2418 + $0x54] sm:$0xf]
    %v2441 = vld [vmem:[%s2418 + $0x58] sm:$0xf]
    %v2442 = vld [vmem:[%s2418 + $0x5c] sm:$0xf]
    %v2443 = vld [vmem:[%s2418 + $0x60] sm:$0xf]
    %v2444 = vld [vmem:[%s2418 + $0x64] sm:$0xf]
    %v2445 = vld [vmem:[%s2418 + $0x68] sm:$0xf]
    %v2446 = vld [vmem:[%s2418 + $0x6c] sm:$0xf]
    %v2447 = vld [vmem:[%s2418 + $0x70] sm:$0xf]
    %v2448 = vld [vmem:[%s2418 + $0x74] sm:$0xf]
    %v2449 = vld [vmem:[%s2418 + $0x78] sm:$0xf]
    %v2450 = vld [vmem:[%s2418 + $0x7c] sm:$0xf]
    %v2483 = vunpack.c.l.b16 %v2419
    %v2484 = vunpack.c.l.b16 %v2420
    %v2485 = vunpack.c.l.b16 %v2421
    %v2486 = vunpack.c.l.b16 %v2422
    %v2487 = vunpack.c.l.b16 %v2423
    %v2488 = vunpack.c.l.b16 %v2424
    %v2489 = vunpack.c.l.b16 %v2425
    %v2490 = vunpack.c.l.b16 %v2426
    %v2491 = vunpack.c.l.b16 %v2427
    %v2492 = vunpack.c.l.b16 %v2428
    %v2493 = vunpack.c.l.b16 %v2429
    %v2494 = vunpack.c.l.b16 %v2430
    %v2495 = vunpack.c.l.b16 %v2431
    %v2496 = vunpack.c.l.b16 %v2432
    %v2497 = vunpack.c.l.b16 %v2433
    %v2498 = vunpack.c.l.b16 %v2434
    %v2499 = vunpack.c.l.b16 %v2435
    %v2500 = vunpack.c.l.b16 %v2436
    %v2501 = vunpack.c.l.b16 %v2437
    %v2502 = vunpack.c.l.b16 %v2438
    %v2503 = vunpack.c.l.b16 %v2439
    %v2504 = vunpack.c.l.b16 %v2440
    %v2505 = vunpack.c.l.b16 %v2441
    %v2506 = vunpack.c.l.b16 %v2442
    %v2507 = vunpack.c.l.b16 %v2443
    %v2508 = vunpack.c.l.b16 %v2444
    %v2509 = vunpack.c.l.b16 %v2445
    %v2510 = vunpack.c.l.b16 %v2446
    %v2511 = vunpack.c.l.b16 %v2447
    %v2512 = vunpack.c.l.b16 %v2448
    %v2513 = vunpack.c.l.b16 %v2449
    %v2514 = vunpack.c.l.b16 %v2450
    %v2515 = vpack.c.b16 %v2484, %v2483
    %v2516 = vpack.c.b16 %v2486, %v2485
    %v2517 = vpack.c.b16 %v2488, %v2487
    %v2518 = vpack.c.b16 %v2490, %v2489
    %v2519 = vpack.c.b16 %v2492, %v2491
    %v2520 = vpack.c.b16 %v2494, %v2493
    %v2521 = vpack.c.b16 %v2496, %v2495
    %v2522 = vpack.c.b16 %v2498, %v2497
    %v2523 = vpack.c.b16 %v2500, %v2499
    %v2524 = vpack.c.b16 %v2502, %v2501
    %v2525 = vpack.c.b16 %v2504, %v2503
    %v2526 = vpack.c.b16 %v2506, %v2505
    %v2527 = vpack.c.b16 %v2508, %v2507
    %v2528 = vpack.c.b16 %v2510, %v2509
    %v2529 = vpack.c.b16 %v2512, %v2511
    %v2530 = vpack.c.b16 %v2514, %v2513
    %2547 = vmatprep.subr.bf16.mxu0 0
    %2548 = vmatpush1.bf16.msra.mxu0 %v2522
    %2549 = vmatprep.subr.bf16.mxu0 0
    %2550 = vmatpush1.bf16.msra.mxu0 %v2521
    %2551 = vmatprep.subr.bf16.mxu0 0
    %2552 = vmatpush1.bf16.msra.mxu0 %v2520
    %2553 = vmatprep.subr.bf16.mxu0 0
    %2554 = vmatpush1.bf16.msra.mxu0 %v2519
    %2555 = vmatprep.subr.bf16.mxu0 0
    %2556 = vmatpush1.bf16.msra.mxu0 %v2518
    %2557 = vmatprep.subr.bf16.mxu0 0
    %2558 = vmatpush1.bf16.msra.mxu0 %v2517
    %2559 = vmatprep.subr.bf16.mxu0 0
    %2560 = vmatpush1.bf16.msra.mxu0 %v2516
    %2561 = vmatprep.subr.bf16.mxu0 0
    %2562 = vmatpush1.bf16.msra.mxu0 %v2515
    %2563 = vmatprep.subr.bf16.mxu0 0
    %2564 = vmatpush2.bf16.msra.mxu0 %v2530
    %2565 = vmatprep.subr.bf16.mxu0 0
    %2566 = vmatpush2.bf16.msra.mxu0 %v2529
    %2567 = vmatprep.subr.bf16.mxu0 0
    %2568 = vmatpush2.bf16.msra.mxu0 %v2528
    %2569 = vmatprep.subr.bf16.mxu0 0
    %2570 = vmatpush2.bf16.msra.mxu0 %v2527
    %2571 = vmatprep.subr.bf16.mxu0 0
    %2572 = vmatpush2.bf16.msra.mxu0 %v2526
    %2573 = vmatprep.subr.bf16.mxu0 0
    %2574 = vmatpush2.bf16.msra.mxu0 %v2525
    %2575 = vmatprep.subr.bf16.mxu0 0
    %2576 = vmatpush2.bf16.msra.mxu0 %v2524
    %2577 = vmatprep.subr.bf16.mxu0 0
    %2578 = vmatpush2.bf16.msra.mxu0 %v2523
    %2579 = vmatprep.mubr.bf16.mxu0 %v2410
    %2580 = vmatmul.mubr.bf16.gmra.mxu0 %v144
    %v2581 = vpop.f32.mrf.mxu0
    %v2582 = vadd.f32 0.0, %v2581
    %v2583 = vpop.f32.mrf.mxu0
    %v2584 = vpop.f32.mrf.mxu0
    %v2585 = vadd.f32 0.0, %v2584
    %v2586 = vpop.f32.mrf.mxu0
    %2587 = vmatprep.mubr.bf16.mxu0 %v2411
    %2588 = vmatmul.mubr.bf16.gmra.mxu0 %v145
    %v2589 = vpop.f32.mrf.mxu0
    %v2590 = vadd.f32 0.0, %v2589
    %v2591 = vpop.f32.mrf.mxu0
    %v2592 = vpop.f32.mrf.mxu0
    %v2593 = vadd.f32 0.0, %v2592
    %v2594 = vpop.f32.mrf.mxu0
    %2595 = vmatprep.mubr.bf16.mxu0 %v2412
    %2596 = vmatmul.mubr.bf16.gmra.mxu0 %v146
    %v2597 = vpop.f32.mrf.mxu0
    %v2598 = vadd.f32 0.0, %v2597
    %v2599 = vpop.f32.mrf.mxu0
    %v2600 = vpop.f32.mrf.mxu0
    %v2601 = vadd.f32 0.0, %v2600
    %v2602 = vpop.f32.mrf.mxu0
    %2603 = vmatprep.mubr.bf16.mxu0 %v2413
    %2604 = vmatmul.mubr.bf16.gmra.mxu0 %v147
    %v2605 = vpop.f32.mrf.mxu0
    %v2606 = vadd.f32 0.0, %v2605
    %v2607 = vpop.f32.mrf.mxu0
    %v2608 = vpop.f32.mrf.mxu0
    %v2609 = vadd.f32 0.0, %v2608
    %v2610 = vpop.f32.mrf.mxu0
    %2611 = vmatprep.mubr.bf16.mxu0 %v2414
    %2612 = vmatmul.mubr.bf16.gmra.mxu0 %v148
    %v2613 = vpop.f32.mrf.mxu0
    %v2614 = vadd.f32 0.0, %v2613
    %v2615 = vpop.f32.mrf.mxu0
    %v2616 = vpop.f32.mrf.mxu0
    %v2617 = vadd.f32 0.0, %v2616
    %v2618 = vpop.f32.mrf.mxu0
    %2619 = vmatprep.mubr.bf16.mxu0 %v2415
    %2620 = vmatmul.mubr.bf16.gmra.mxu0 %v149
    %v2621 = vpop.f32.mrf.mxu0
    %v2622 = vadd.f32 0.0, %v2621
    %v2623 = vpop.f32.mrf.mxu0
    %v2624 = vpop.f32.mrf.mxu0
    %v2625 = vadd.f32 0.0, %v2624
    %v2626 = vpop.f32.mrf.mxu0
    %2627 = vmatprep.mubr.bf16.mxu0 %v2416
    %2628 = vmatmul.mubr.bf16.gmra.mxu0 %v150
    %v2629 = vpop.f32.mrf.mxu0
    %v2630 = vadd.f32 0.0, %v2629
    %v2631 = vpop.f32.mrf.mxu0
    %v2632 = vpop.f32.mrf.mxu0
    %v2633 = vadd.f32 0.0, %v2632
    %v2634 = vpop.f32.mrf.mxu0
    %2635 = vmatprep.mubr.bf16.mxu0 %v2417
    %2636 = vmatmul.mubr.bf16.gmra.mxu0 %v151
    %v2637 = vpop.f32.mrf.mxu0
    %v2638 = vadd.f32 0.0, %v2637
    %v2639 = vpop.f32.mrf.mxu0
    %v2640 = vpop.f32.mrf.mxu0
    %v2641 = vadd.f32 0.0, %v2640
    %v2642 = vpop.f32.mrf.mxu0
    %2643 = vdwg.mxu0
    %v2644 = vadd.f32 %v107, %v2582
    %v2645 = vadd.f32 %v108, %v2585
    %v2646 = vadd.f32 %v109, %v2590
    %v2647 = vadd.f32 %v110, %v2593
    %v2648 = vadd.f32 %v111, %v2598
    %v2649 = vadd.f32 %v112, %v2601
    %v2650 = vadd.f32 %v113, %v2606
    %v2651 = vadd.f32 %v114, %v2609
    %v2652 = vadd.f32 %v115, %v2614
    %v2653 = vadd.f32 %v116, %v2617
    %v2654 = vadd.f32 %v117, %v2622
    %v2655 = vadd.f32 %v118, %v2625
    %v2656 = vadd.f32 %v119, %v2630
    %v2657 = vadd.f32 %v120, %v2633
    %v2658 = vadd.f32 %v121, %v2638
    %v2659 = vadd.f32 %v122, %v2641
    %v2660 = vld [vmem:[#allocation11 + $0xa] sm:$0x1]
    %v2661 = vlaneseq
    %v2662 = vshrl.u32 %v2661, 7
    %v2663 = vsub.s32 0, %v2662
    %v2664 = vrot.slane %v2660, %v2663
    %v2665 = vadd.f32 %v2644, %v2664
    %v2666 = vadd.f32 %v2645, %v2664
    %v2667 = vadd.f32 %v2646, %v2664
    %v2668 = vadd.f32 %v2647, %v2664
    %v2669 = vadd.f32 %v2648, %v2664
    %v2670 = vadd.f32 %v2649, %v2664
    %v2671 = vadd.f32 %v2650, %v2664
    %v2672 = vadd.f32 %v2651, %v2664
    %v2673 = vadd.f32 %v2652, %v2664
    %v2674 = vadd.f32 %v2653, %v2664
    %v2675 = vadd.f32 %v2654, %v2664
    %v2676 = vadd.f32 %v2655, %v2664
    %v2677 = vadd.f32 %v2656, %v2664
    %v2678 = vadd.f32 %v2657, %v2664
    %v2679 = vadd.f32 %v2658, %v2664
    %v2680 = vadd.f32 %v2659, %v2664
    %2681 = vst [vmem:[#allocation13] sm:$0xff] %v2665
    %2682 = vst [vmem:[#allocation13 + $0x8] sm:$0xff] %v2666
    %2683 = vst [vmem:[#allocation13 + $0x10] sm:$0xff] %v2667
    %2684 = vst [vmem:[#allocation13 + $0x18] sm:$0xff] %v2668
    %2685 = vst [vmem:[#allocation13 + $0x20] sm:$0xff] %v2669
    %2686 = vst [vmem:[#allocation13 + $0x28] sm:$0xff] %v2670
    %2687 = vst [vmem:[#allocation13 + $0x30] sm:$0xff] %v2671
    %2688 = vst [vmem:[#allocation13 + $0x38] sm:$0xff] %v2672
    %2689 = vst [vmem:[#allocation13 + $0x40] sm:$0xff] %v2673
    %2690 = vst [vmem:[#allocation13 + $0x48] sm:$0xff] %v2674
    %2691 = vst [vmem:[#allocation13 + $0x50] sm:$0xff] %v2675
    %2692 = vst [vmem:[#allocation13 + $0x58] sm:$0xff] %v2676
    %2693 = vst [vmem:[#allocation13 + $0x60] sm:$0xff] %v2677
    %2694 = vst [vmem:[#allocation13 + $0x68] sm:$0xff] %v2678
    %2695 = vst [vmem:[#allocation13 + $0x70] sm:$0xff] %v2679
    %2696 = vst [vmem:[#allocation13 + $0x78] sm:$0xff] %v2680
    // Predicated region
    $region50: #{tpu_custom_call.1} parent=1 // pred_check
      _
    $region51: #{tpu_custom_call.1} parent=1 // pred_check_branch
      %2698 = sbr.rel (0) target = $region53
    $region52: #{tpu_custom_call.1} parent=1 // pred_region
      %s2700 = ssub.s32 2048, 2048
      %2701 = vsyncadd [#allocation4], %s2700
      %s2702 = sshll.u32 [#allocation13], 4
      %s2703 = int_to_ptr.vmem [resolvable:$true] %s2702
      %2708 = dma.vmem_to_hbm [thread:$0]  %s2703, 2048, %s6, [#allocation4], 128, 128, 8
    $region53: #{tpu_custom_call.1} parent=1 // pred_fallthru
      _
    // Predicated region
    $region54: #{tpu_custom_call.1} parent=1 // pred_check
      _
    $region55: #{tpu_custom_call.1} parent=1 // pred_check_branch
      %2710 = sbr.rel (0) target = $region57
    $region56: #{tpu_custom_call.1} parent=1 // pred_region
      %2711 = dma.done [#allocation4], 2048
    $region57: #{tpu_custom_call.1} parent=1 // pred_fallthru
      _
    %2712 = vsyncpa [#allocation3], 1
    %2713 = vsyncpa [#allocation6], 1
    %2714 = vsyncpa [#allocation9], 1
    %2715 = vsyncpa [#allocation12], 1
    %2716 = vsyncpa [#allocation4], 1

</llo_original>
